<compile_context>
chip_gen: v7x
topology: tpu7x:2x2x1
jax: 0.10.0
libtpu: 0.0.40
codegen_flags: <defaults>
</compile_context>

<pallas_src>
import jax
import jax.numpy as jnp
from jax.experimental import pallas as pl
from jax.experimental.pallas import tpu as pltpu

SEQ_LEN = 8
INPUT_SIZE = 1
HIDDEN = 32            # small stand-in for hidden_layer_size=100
OUTPUT_SIZE = 1


def _round_up(n, m):
    return ((n + m - 1) // m) * m


H_PAD = _round_up(HIDDEN, 128)          # 128 lanes per gate block
OUT_PAD = _round_up(OUTPUT_SIZE, 128)   # lane-dense output store


def lstm_kernel(x_ref, wih_ref, whh_ref, b_ref, lw_ref, lb_ref, out_ref):
    HP = H_PAD
    L = x_ref.shape[0]

    # --- hoisted input projection (VPU broadcast, INPUT_SIZE == 1) ----------
    x = x_ref[...]                               # (L, 1)
    pre = x * wih_ref[...] + b_ref[...]          # (L,1)*(1,4HP)+(1,4HP) -> (L, 4HP)

    # Recurrent weight read once; reused by every unrolled step.
    whh = whh_ref[...]                           # (HP, 4HP)

    h = jnp.zeros((1, HP), jnp.float32)
    c = jnp.zeros((1, HP), jnp.float32)

    # --- statically unrolled recurrence (L is a compile-time constant) ------
    for t in range(L):
        gates = pre[t:t + 1, :] + jnp.dot(h, whh,
                                          preferred_element_type=jnp.float32)
        # Two EUP passes over the whole gate vector instead of four per-gate
        # calls; slices land on 128-lane boundaries (free).
        sig = jax.nn.sigmoid(gates)
        tnh = jnp.tanh(gates)
        i = sig[:, 0 * HP:1 * HP]
        f = sig[:, 1 * HP:2 * HP]
        g = tnh[:, 2 * HP:3 * HP]
        o = sig[:, 3 * HP:4 * HP]
        c = f * c + i * g
        h = o * jnp.tanh(c)

    # Linear head on the final hidden state == predictions[-1]
    out_ref[...] = (jnp.dot(h, lw_ref[...], preferred_element_type=jnp.float32)
                    + lb_ref[...])


def prepare_params(wih, whh, b_ih, b_hh, lin_w, lin_b):
    """PyTorch-layout params -> transposed, per-gate lane-padded kernel layout."""
    H, HP = HIDDEN, H_PAD
    wih_t = wih.T                                  # (input_size, 4H), gates i,f,g,o
    whh_t = whh.T                                  # (H, 4H)
    bias = (b_ih + b_hh)[None, :]                  # (1, 4H)

    def pad_gate_cols(a):                          # (..., 4H) -> (..., 4*HP)
        parts = [a[..., k * H:(k + 1) * H] for k in range(4)]
        pad = [(0, 0)] * (a.ndim - 1) + [(0, HP - H)]
        return jnp.concatenate([jnp.pad(p, pad) for p in parts], axis=-1)

    wih_p = pad_gate_cols(wih_t)                                   # (in, 4HP)
    whh_p = jnp.pad(pad_gate_cols(whh_t), ((0, HP - H), (0, 0)))   # (HP, 4HP)
    bias_p = pad_gate_cols(bias)                                   # (1, 4HP)
    lw_p = jnp.pad(lin_w.T, ((0, HP - H), (0, OUT_PAD - OUTPUT_SIZE)))  # (HP, OUT_PAD)
    lb_p = jnp.pad(lin_b[None, :], ((0, 0), (0, OUT_PAD - OUTPUT_SIZE)))  # (1, OUT_PAD)
    return wih_p, whh_p, bias_p, lw_p, lb_p


def lstm_forward(x_seq, wih_p, whh_p, bias_p, lw_p, lb_p):
    """x_seq: (L, input_size). Returns prediction for the last step: (output_size,)."""
    vmem = lambda: pl.BlockSpec(memory_space=pltpu.MemorySpace.VMEM)
    out = pl.pallas_call(
        lstm_kernel,
        out_shape=jax.ShapeDtypeStruct((1, OUT_PAD), jnp.float32),
        in_specs=[vmem() for _ in range(6)],
        out_specs=vmem(),
    )(x_seq, wih_p, whh_p, bias_p, lw_p, lb_p)
    return out[0, :OUTPUT_SIZE]


def lstm_forward_ref(x_seq, wih, whh, b_ih, b_hh, lin_w, lin_b):
    """Pure-JAX reference (unpadded, PyTorch layout) for correctness checking."""
    H = HIDDEN
    wih_t, whh_t = wih.T, whh.T
    bias = (b_ih + b_hh)[None, :]
    h = jnp.zeros((1, H), jnp.float32)
    c = jnp.zeros((1, H), jnp.float32)
    for t in range(x_seq.shape[0]):
        gates = x_seq[t:t + 1] @ wih_t + h @ whh_t + bias
        i = jax.nn.sigmoid(gates[:, 0 * H:1 * H])
        f = jax.nn.sigmoid(gates[:, 1 * H:2 * H])
        g = jnp.tanh(gates[:, 2 * H:3 * H])
        o = jax.nn.sigmoid(gates[:, 3 * H:4 * H])
        c = f * c + i * g
        h = o * jnp.tanh(c)
    return (h @ lin_w.T + lin_b[None, :])[0]


if __name__ == "__main__":
    # TODO(synk): nn.LSTM's persistent self.hidden_cell carried across forward()
    # calls is not modeled; each call starts from zero (h0, c0) as in training use.
    key = jax.random.PRNGKey(0)
    k_x, k_wih, k_whh, k_bih, k_bhh, k_lw, k_lb = jax.random.split(key, 7)

    # Deterministic synthetic parameters (PyTorch-style U(-1/sqrt(H), 1/sqrt(H))).
    bound = 1.0 / (HIDDEN ** 0.5)
    wih = jax.random.uniform(k_wih, (4 * HIDDEN, INPUT_SIZE), jnp.float32, -bound, bound)
    whh = jax.random.uniform(k_whh, (4 * HIDDEN, HIDDEN), jnp.float32, -bound, bound)
    b_ih = jax.random.uniform(k_bih, (4 * HIDDEN,), jnp.float32, -bound, bound)
    b_hh = jax.random.uniform(k_bhh, (4 * HIDDEN,), jnp.float32, -bound, bound)
    lin_w = jax.random.uniform(k_lw, (OUTPUT_SIZE, HIDDEN), jnp.float32, -bound, bound)
    lin_b = jax.random.uniform(k_lb, (OUTPUT_SIZE,), jnp.float32, -bound, bound)

    wih_p, whh_p, bias_p, lw_p, lb_p = prepare_params(wih, whh, b_ih, b_hh, lin_w, lin_b)

    # Input: torch forward does input_seq.view(len, 1, -1); take (L,) -> (L, 1).
    x_seq = jax.random.uniform(k_x, (SEQ_LEN,), jnp.float32, -1.0, 1.0).reshape(
        SEQ_LEN, INPUT_SIZE)

    pred = lstm_forward(x_seq, wih_p, whh_p, bias_p, lw_p, lb_p)
    pred = jax.block_until_ready(pred)

    ref = lstm_forward_ref(x_seq, wih, whh, b_ih, b_hh, lin_w, lin_b)
    assert pred.shape == (OUTPUT_SIZE,)
    assert jnp.allclose(pred, ref, atol=1e-5, rtol=1e-5)

    print("KERNEL_OK")
</pallas_src>

<mosaic_0001>
module attributes {stable_mosaic.version = 11 : i64} {
  func.func @lstm_kernel(%arg0: memref<8x1xf32, #tpu.memory_space<vmem>>, %arg1: memref<1x512xf32, #tpu.memory_space<vmem>>, %arg2: memref<128x512xf32, #tpu.memory_space<vmem>>, %arg3: memref<1x512xf32, #tpu.memory_space<vmem>>, %arg4: memref<128x128xf32, #tpu.memory_space<vmem>>, %arg5: memref<1x128xf32, #tpu.memory_space<vmem>>, %arg6: memref<1x128xf32, #tpu.memory_space<vmem>>) attributes {dimension_semantics = [], scalar_prefetch = 0 : i64, scratch_operands = 0 : i64, tpu.core_type = #tpu.core_type<tc>} {
    %c0 = arith.constant 0 : index
    %c0_0 = arith.constant 0 : index
    %0 = vector.load %arg0[%c0, %c0_0] : memref<8x1xf32, #tpu.memory_space<vmem>>, vector<8x1xf32>
    %c0_1 = arith.constant 0 : index
    %c0_2 = arith.constant 0 : index
    %1 = vector.load %arg1[%c0_1, %c0_2] : memref<1x512xf32, #tpu.memory_space<vmem>>, vector<1x512xf32>
    %2 = vector.broadcast %0 : vector<8x1xf32> to vector<8x512xf32>
    %3 = vector.broadcast %1 : vector<1x512xf32> to vector<8x512xf32>
    %4 = arith.mulf %2, %3 : vector<8x512xf32>
    %c0_3 = arith.constant 0 : index
    %c0_4 = arith.constant 0 : index
    %5 = vector.load %arg3[%c0_3, %c0_4] : memref<1x512xf32, #tpu.memory_space<vmem>>, vector<1x512xf32>
    %6 = vector.broadcast %5 : vector<1x512xf32> to vector<8x512xf32>
    %7 = arith.addf %4, %6 : vector<8x512xf32>
    %c0_5 = arith.constant 0 : index
    %c0_6 = arith.constant 0 : index
    %8 = vector.load %arg2[%c0_5, %c0_6] : memref<128x512xf32, #tpu.memory_space<vmem>>, vector<128x512xf32>
    %cst = arith.constant 0.000000e+00 : f32
    %9 = vector.broadcast %cst : f32 to vector<1x128xf32>
    %cst_7 = arith.constant 0.000000e+00 : f32
    %10 = vector.broadcast %cst_7 : f32 to vector<1x128xf32>
    %11 = vector.extract_strided_slice %7 {offsets = [0, 0], sizes = [1, 512], strides = [1, 1]} : vector<8x512xf32> to vector<1x512xf32>
    %cst_8 = arith.constant dense<0.000000e+00> : vector<1x512xf32>
    %12 = tpu.matmul %9, %8, %cst_8 {dimension_numbers = #tpu.dot_dimension_numbers<[1], [0], [0], [1], [0, 0, 1, 1], [], []>} : vector<1x128xf32>, vector<128x512xf32>, vector<1x512xf32> -> vector<1x512xf32>
    %13 = arith.addf %11, %12 : vector<1x512xf32>
    %14 = arith.negf %13 : vector<1x512xf32>
    %15 = math.exp %14 : vector<1x512xf32>
    %cst_9 = arith.constant 1.000000e+00 : f32
    %16 = vector.broadcast %cst_9 : f32 to vector<1x512xf32>
    %17 = arith.addf %16, %15 : vector<1x512xf32>
    %18 = arith.divf %16, %17 : vector<1x512xf32>
    %19 = math.tanh %13 : vector<1x512xf32>
    %20 = vector.extract_strided_slice %18 {offsets = [0, 0], sizes = [1, 128], strides = [1, 1]} : vector<1x512xf32> to vector<1x128xf32>
    %21 = vector.extract_strided_slice %18 {offsets = [0, 128], sizes = [1, 128], strides = [1, 1]} : vector<1x512xf32> to vector<1x128xf32>
    %22 = vector.extract_strided_slice %19 {offsets = [0, 256], sizes = [1, 128], strides = [1, 1]} : vector<1x512xf32> to vector<1x128xf32>
    %23 = vector.extract_strided_slice %18 {offsets = [0, 384], sizes = [1, 128], strides = [1, 1]} : vector<1x512xf32> to vector<1x128xf32>
    %24 = arith.mulf %21, %10 : vector<1x128xf32>
    %25 = arith.mulf %20, %22 : vector<1x128xf32>
    %26 = arith.addf %24, %25 : vector<1x128xf32>
    %27 = math.tanh %26 : vector<1x128xf32>
    %28 = arith.mulf %23, %27 : vector<1x128xf32>
    %29 = vector.extract_strided_slice %7 {offsets = [1, 0], sizes = [1, 512], strides = [1, 1]} : vector<8x512xf32> to vector<1x512xf32>
    %cst_10 = arith.constant dense<0.000000e+00> : vector<1x512xf32>
    %30 = tpu.matmul %28, %8, %cst_10 {dimension_numbers = #tpu.dot_dimension_numbers<[1], [0], [0], [1], [0, 0, 1, 1], [], []>} : vector<1x128xf32>, vector<128x512xf32>, vector<1x512xf32> -> vector<1x512xf32>
    %31 = arith.addf %29, %30 : vector<1x512xf32>
    %32 = arith.negf %31 : vector<1x512xf32>
    %33 = math.exp %32 : vector<1x512xf32>
    %cst_11 = arith.constant 1.000000e+00 : f32
    %34 = vector.broadcast %cst_11 : f32 to vector<1x512xf32>
    %35 = arith.addf %34, %33 : vector<1x512xf32>
    %36 = arith.divf %34, %35 : vector<1x512xf32>
    %37 = math.tanh %31 : vector<1x512xf32>
    %38 = vector.extract_strided_slice %36 {offsets = [0, 0], sizes = [1, 128], strides = [1, 1]} : vector<1x512xf32> to vector<1x128xf32>
    %39 = vector.extract_strided_slice %36 {offsets = [0, 128], sizes = [1, 128], strides = [1, 1]} : vector<1x512xf32> to vector<1x128xf32>
    %40 = vector.extract_strided_slice %37 {offsets = [0, 256], sizes = [1, 128], strides = [1, 1]} : vector<1x512xf32> to vector<1x128xf32>
    %41 = vector.extract_strided_slice %36 {offsets = [0, 384], sizes = [1, 128], strides = [1, 1]} : vector<1x512xf32> to vector<1x128xf32>
    %42 = arith.mulf %39, %26 : vector<1x128xf32>
    %43 = arith.mulf %38, %40 : vector<1x128xf32>
    %44 = arith.addf %42, %43 : vector<1x128xf32>
    %45 = math.tanh %44 : vector<1x128xf32>
    %46 = arith.mulf %41, %45 : vector<1x128xf32>
    %47 = vector.extract_strided_slice %7 {offsets = [2, 0], sizes = [1, 512], strides = [1, 1]} : vector<8x512xf32> to vector<1x512xf32>
    %cst_12 = arith.constant dense<0.000000e+00> : vector<1x512xf32>
    %48 = tpu.matmul %46, %8, %cst_12 {dimension_numbers = #tpu.dot_dimension_numbers<[1], [0], [0], [1], [0, 0, 1, 1], [], []>} : vector<1x128xf32>, vector<128x512xf32>, vector<1x512xf32> -> vector<1x512xf32>
    %49 = arith.addf %47, %48 : vector<1x512xf32>
    %50 = arith.negf %49 : vector<1x512xf32>
    %51 = math.exp %50 : vector<1x512xf32>
    %cst_13 = arith.constant 1.000000e+00 : f32
    %52 = vector.broadcast %cst_13 : f32 to vector<1x512xf32>
    %53 = arith.addf %52, %51 : vector<1x512xf32>
    %54 = arith.divf %52, %53 : vector<1x512xf32>
    %55 = math.tanh %49 : vector<1x512xf32>
    %56 = vector.extract_strided_slice %54 {offsets = [0, 0], sizes = [1, 128], strides = [1, 1]} : vector<1x512xf32> to vector<1x128xf32>
    %57 = vector.extract_strided_slice %54 {offsets = [0, 128], sizes = [1, 128], strides = [1, 1]} : vector<1x512xf32> to vector<1x128xf32>
    %58 = vector.extract_strided_slice %55 {offsets = [0, 256], sizes = [1, 128], strides = [1, 1]} : vector<1x512xf32> to vector<1x128xf32>
    %59 = vector.extract_strided_slice %54 {offsets = [0, 384], sizes = [1, 128], strides = [1, 1]} : vector<1x512xf32> to vector<1x128xf32>
    %60 = arith.mulf %57, %44 : vector<1x128xf32>
    %61 = arith.mulf %56, %58 : vector<1x128xf32>
    %62 = arith.addf %60, %61 : vector<1x128xf32>
    %63 = math.tanh %62 : vector<1x128xf32>
    %64 = arith.mulf %59, %63 : vector<1x128xf32>
    %65 = vector.extract_strided_slice %7 {offsets = [3, 0], sizes = [1, 512], strides = [1, 1]} : vector<8x512xf32> to vector<1x512xf32>
    %cst_14 = arith.constant dense<0.000000e+00> : vector<1x512xf32>
    %66 = tpu.matmul %64, %8, %cst_14 {dimension_numbers = #tpu.dot_dimension_numbers<[1], [0], [0], [1], [0, 0, 1, 1], [], []>} : vector<1x128xf32>, vector<128x512xf32>, vector<1x512xf32> -> vector<1x512xf32>
    %67 = arith.addf %65, %66 : vector<1x512xf32>
    %68 = arith.negf %67 : vector<1x512xf32>
    %69 = math.exp %68 : vector<1x512xf32>
    %cst_15 = arith.constant 1.000000e+00 : f32
    %70 = vector.broadcast %cst_15 : f32 to vector<1x512xf32>
    %71 = arith.addf %70, %69 : vector<1x512xf32>
    %72 = arith.divf %70, %71 : vector<1x512xf32>
    %73 = math.tanh %67 : vector<1x512xf32>
    %74 = vector.extract_strided_slice %72 {offsets = [0, 0], sizes = [1, 128], strides = [1, 1]} : vector<1x512xf32> to vector<1x128xf32>
    %75 = vector.extract_strided_slice %72 {offsets = [0, 128], sizes = [1, 128], strides = [1, 1]} : vector<1x512xf32> to vector<1x128xf32>
    %76 = vector.extract_strided_slice %73 {offsets = [0, 256], sizes = [1, 128], strides = [1, 1]} : vector<1x512xf32> to vector<1x128xf32>
    %77 = vector.extract_strided_slice %72 {offsets = [0, 384], sizes = [1, 128], strides = [1, 1]} : vector<1x512xf32> to vector<1x128xf32>
    %78 = arith.mulf %75, %62 : vector<1x128xf32>
    %79 = arith.mulf %74, %76 : vector<1x128xf32>
    %80 = arith.addf %78, %79 : vector<1x128xf32>
    %81 = math.tanh %80 : vector<1x128xf32>
    %82 = arith.mulf %77, %81 : vector<1x128xf32>
    %83 = vector.extract_strided_slice %7 {offsets = [4, 0], sizes = [1, 512], strides = [1, 1]} : vector<8x512xf32> to vector<1x512xf32>
    %cst_16 = arith.constant dense<0.000000e+00> : vector<1x512xf32>
    %84 = tpu.matmul %82, %8, %cst_16 {dimension_numbers = #tpu.dot_dimension_numbers<[1], [0], [0], [1], [0, 0, 1, 1], [], []>} : vector<1x128xf32>, vector<128x512xf32>, vector<1x512xf32> -> vector<1x512xf32>
    %85 = arith.addf %83, %84 : vector<1x512xf32>
    %86 = arith.negf %85 : vector<1x512xf32>
    %87 = math.exp %86 : vector<1x512xf32>
    %cst_17 = arith.constant 1.000000e+00 : f32
    %88 = vector.broadcast %cst_17 : f32 to vector<1x512xf32>
    %89 = arith.addf %88, %87 : vector<1x512xf32>
    %90 = arith.divf %88, %89 : vector<1x512xf32>
    %91 = math.tanh %85 : vector<1x512xf32>
    %92 = vector.extract_strided_slice %90 {offsets = [0, 0], sizes = [1, 128], strides = [1, 1]} : vector<1x512xf32> to vector<1x128xf32>
    %93 = vector.extract_strided_slice %90 {offsets = [0, 128], sizes = [1, 128], strides = [1, 1]} : vector<1x512xf32> to vector<1x128xf32>
    %94 = vector.extract_strided_slice %91 {offsets = [0, 256], sizes = [1, 128], strides = [1, 1]} : vector<1x512xf32> to vector<1x128xf32>
    %95 = vector.extract_strided_slice %90 {offsets = [0, 384], sizes = [1, 128], strides = [1, 1]} : vector<1x512xf32> to vector<1x128xf32>
    %96 = arith.mulf %93, %80 : vector<1x128xf32>
    %97 = arith.mulf %92, %94 : vector<1x128xf32>
    %98 = arith.addf %96, %97 : vector<1x128xf32>
    %99 = math.tanh %98 : vector<1x128xf32>
    %100 = arith.mulf %95, %99 : vector<1x128xf32>
    %101 = vector.extract_strided_slice %7 {offsets = [5, 0], sizes = [1, 512], strides = [1, 1]} : vector<8x512xf32> to vector<1x512xf32>
    %cst_18 = arith.constant dense<0.000000e+00> : vector<1x512xf32>
    %102 = tpu.matmul %100, %8, %cst_18 {dimension_numbers = #tpu.dot_dimension_numbers<[1], [0], [0], [1], [0, 0, 1, 1], [], []>} : vector<1x128xf32>, vector<128x512xf32>, vector<1x512xf32> -> vector<1x512xf32>
    %103 = arith.addf %101, %102 : vector<1x512xf32>
    %104 = arith.negf %103 : vector<1x512xf32>
    %105 = math.exp %104 : vector<1x512xf32>
    %cst_19 = arith.constant 1.000000e+00 : f32
    %106 = vector.broadcast %cst_19 : f32 to vector<1x512xf32>
    %107 = arith.addf %106, %105 : vector<1x512xf32>
    %108 = arith.divf %106, %107 : vector<1x512xf32>
    %109 = math.tanh %103 : vector<1x512xf32>
    %110 = vector.extract_strided_slice %108 {offsets = [0, 0], sizes = [1, 128], strides = [1, 1]} : vector<1x512xf32> to vector<1x128xf32>
    %111 = vector.extract_strided_slice %108 {offsets = [0, 128], sizes = [1, 128], strides = [1, 1]} : vector<1x512xf32> to vector<1x128xf32>
    %112 = vector.extract_strided_slice %109 {offsets = [0, 256], sizes = [1, 128], strides = [1, 1]} : vector<1x512xf32> to vector<1x128xf32>
    %113 = vector.extract_strided_slice %108 {offsets = [0, 384], sizes = [1, 128], strides = [1, 1]} : vector<1x512xf32> to vector<1x128xf32>
    %114 = arith.mulf %111, %98 : vector<1x128xf32>
    %115 = arith.mulf %110, %112 : vector<1x128xf32>
    %116 = arith.addf %114, %115 : vector<1x128xf32>
    %117 = math.tanh %116 : vector<1x128xf32>
    %118 = arith.mulf %113, %117 : vector<1x128xf32>
    %119 = vector.extract_strided_slice %7 {offsets = [6, 0], sizes = [1, 512], strides = [1, 1]} : vector<8x512xf32> to vector<1x512xf32>
    %cst_20 = arith.constant dense<0.000000e+00> : vector<1x512xf32>
    %120 = tpu.matmul %118, %8, %cst_20 {dimension_numbers = #tpu.dot_dimension_numbers<[1], [0], [0], [1], [0, 0, 1, 1], [], []>} : vector<1x128xf32>, vector<128x512xf32>, vector<1x512xf32> -> vector<1x512xf32>
    %121 = arith.addf %119, %120 : vector<1x512xf32>
    %122 = arith.negf %121 : vector<1x512xf32>
    %123 = math.exp %122 : vector<1x512xf32>
    %cst_21 = arith.constant 1.000000e+00 : f32
    %124 = vector.broadcast %cst_21 : f32 to vector<1x512xf32>
    %125 = arith.addf %124, %123 : vector<1x512xf32>
    %126 = arith.divf %124, %125 : vector<1x512xf32>
    %127 = math.tanh %121 : vector<1x512xf32>
    %128 = vector.extract_strided_slice %126 {offsets = [0, 0], sizes = [1, 128], strides = [1, 1]} : vector<1x512xf32> to vector<1x128xf32>
    %129 = vector.extract_strided_slice %126 {offsets = [0, 128], sizes = [1, 128], strides = [1, 1]} : vector<1x512xf32> to vector<1x128xf32>
    %130 = vector.extract_strided_slice %127 {offsets = [0, 256], sizes = [1, 128], strides = [1, 1]} : vector<1x512xf32> to vector<1x128xf32>
    %131 = vector.extract_strided_slice %126 {offsets = [0, 384], sizes = [1, 128], strides = [1, 1]} : vector<1x512xf32> to vector<1x128xf32>
    %132 = arith.mulf %129, %116 : vector<1x128xf32>
    %133 = arith.mulf %128, %130 : vector<1x128xf32>
    %134 = arith.addf %132, %133 : vector<1x128xf32>
    %135 = math.tanh %134 : vector<1x128xf32>
    %136 = arith.mulf %131, %135 : vector<1x128xf32>
    %137 = vector.extract_strided_slice %7 {offsets = [7, 0], sizes = [1, 512], strides = [1, 1]} : vector<8x512xf32> to vector<1x512xf32>
    %cst_22 = arith.constant dense<0.000000e+00> : vector<1x512xf32>
    %138 = tpu.matmul %136, %8, %cst_22 {dimension_numbers = #tpu.dot_dimension_numbers<[1], [0], [0], [1], [0, 0, 1, 1], [], []>} : vector<1x128xf32>, vector<128x512xf32>, vector<1x512xf32> -> vector<1x512xf32>
    %139 = arith.addf %137, %138 : vector<1x512xf32>
    %140 = arith.negf %139 : vector<1x512xf32>
    %141 = math.exp %140 : vector<1x512xf32>
    %cst_23 = arith.constant 1.000000e+00 : f32
    %142 = vector.broadcast %cst_23 : f32 to vector<1x512xf32>
    %143 = arith.addf %142, %141 : vector<1x512xf32>
    %144 = arith.divf %142, %143 : vector<1x512xf32>
    %145 = math.tanh %139 : vector<1x512xf32>
    %146 = vector.extract_strided_slice %144 {offsets = [0, 0], sizes = [1, 128], strides = [1, 1]} : vector<1x512xf32> to vector<1x128xf32>
    %147 = vector.extract_strided_slice %144 {offsets = [0, 128], sizes = [1, 128], strides = [1, 1]} : vector<1x512xf32> to vector<1x128xf32>
    %148 = vector.extract_strided_slice %145 {offsets = [0, 256], sizes = [1, 128], strides = [1, 1]} : vector<1x512xf32> to vector<1x128xf32>
    %149 = vector.extract_strided_slice %144 {offsets = [0, 384], sizes = [1, 128], strides = [1, 1]} : vector<1x512xf32> to vector<1x128xf32>
    %150 = arith.mulf %147, %134 : vector<1x128xf32>
    %151 = arith.mulf %146, %148 : vector<1x128xf32>
    %152 = arith.addf %150, %151 : vector<1x128xf32>
    %153 = math.tanh %152 : vector<1x128xf32>
    %154 = arith.mulf %149, %153 : vector<1x128xf32>
    %c0_24 = arith.constant 0 : index
    %c0_25 = arith.constant 0 : index
    %155 = vector.load %arg4[%c0_24, %c0_25] : memref<128x128xf32, #tpu.memory_space<vmem>>, vector<128x128xf32>
    %cst_26 = arith.constant dense<0.000000e+00> : vector<1x128xf32>
    %156 = tpu.matmul %154, %155, %cst_26 {dimension_numbers = #tpu.dot_dimension_numbers<[1], [0], [0], [1], [0, 0, 1, 1], [], []>} : vector<1x128xf32>, vector<128x128xf32>, vector<1x128xf32> -> vector<1x128xf32>
    %c0_27 = arith.constant 0 : index
    %c0_28 = arith.constant 0 : index
    %157 = vector.load %arg5[%c0_27, %c0_28] : memref<1x128xf32, #tpu.memory_space<vmem>>, vector<1x128xf32>
    %158 = arith.addf %156, %157 : vector<1x128xf32>
    %c0_29 = arith.constant 0 : index
    %c0_30 = arith.constant 0 : index
    %159 = vector.load %arg6[%c0_29, %c0_30] : memref<1x128xf32, #tpu.memory_space<vmem>>, vector<1x128xf32>
    tpu.vector_store %arg6[%c0_29, %c0_30], %158 {strides = array<i32>} : memref<1x128xf32, #tpu.memory_space<vmem>>, vector<1x128xf32>,
    return
  }
}

</mosaic_0001>

<llo_original>
// kernel: tpu_custom_call.1
$region0: #{tpu_custom_call.1}
  #allocation0 [shape = 'u32[]', space=smem, size = 0x4, offset = 0x4, fixed_abs, tag = 'smem constant byte address 0x4 - core index']
  #allocation1 [shape = 'u32[144,128]{1,0:T(1,128)}', space=vmem, size = 0x12000, scoped, tag = 'internal scratch']
  %s0 = inlined_call_operand.vmem [shape: f32[8,1], index: 0, kind: input, shape index: {}]
  %s1 = inlined_call_operand.vmem [shape: f32[1,512], index: 1, kind: input, shape index: {}]
  %s2 = inlined_call_operand.hbm [shape: f32[128,512], index: 2, kind: input, shape index: {}]
  %s3 = inlined_call_operand.vmem [shape: f32[1,512], index: 3, kind: input, shape index: {}]
  %s4 = inlined_call_operand.hbm [shape: f32[128,128], index: 4, kind: input, shape index: {}]
  %s5 = inlined_call_operand.vmem [shape: f32[1,128], index: 5, kind: input, shape index: {}]
  %s6 = inlined_call_operand.hbm [shape: f32[1,128], index: 6, kind: output, shape index: {}]
  %s7 = sld [smem:[#allocation0]]
  $region42: #{tpu_custom_call.1} parent=0
    _
  %s9 = ssub.s32 1, %s7
  %s10 = scalar_select 0, %s9, %s7
  $region1: #{tpu_custom_call.1} parent=0
    #allocation2 [shape = 'u8[262144]{0}', space=vmem, size = 0x40000, scoped, tag = 'input window, operand 2, single buffered']
    #allocation3 [shape = 's32[1]{0}', space=sflag, size = 0x4, scoped, tag = 'scoped memory for tpu_custom_call.1']
    #allocation4 [shape = 's32[1]{0}', space=sflag, size = 0x4, scoped, tag = 'scoped memory for tpu_custom_call.1']
    #allocation5 [shape = 'u8[65536]{0}', space=vmem, size = 0x10000, scoped, tag = 'input window, operand 4, single buffered']
    #allocation6 [shape = 's32[1]{0}', space=sflag, size = 0x4, scoped, tag = 'scoped memory for tpu_custom_call.1']
    #allocation7 [shape = 'u8[512]{0}', space=vmem, size = 0x400, scoped, tag = 'output window, operand 0, single buffered']
    %11 = vsyncpa [#allocation3], 0
    %12 = vsyncpa [#allocation6], 0
    %13 = vsyncpa [#allocation4], 0
    // Predicated region
    $region2: #{tpu_custom_call.1} parent=1 // pred_check
      _
    $region3: #{tpu_custom_call.1} parent=1 // pred_check_branch
      %15 = sbr.rel (0) target = $region5
    $region4: #{tpu_custom_call.1} parent=1 // pred_region
      _
    $region5: #{tpu_custom_call.1} parent=1 // pred_fallthru
      _
    // Predicated region
    $region6: #{tpu_custom_call.1} parent=1 // pred_check
      _
    $region7: #{tpu_custom_call.1} parent=1 // pred_check_branch
      %17 = sbr.rel (0) target = $region9
    $region8: #{tpu_custom_call.1} parent=1 // pred_region
      _
    $region9: #{tpu_custom_call.1} parent=1 // pred_fallthru
      _
    // Predicated region
    $region10: #{tpu_custom_call.1} parent=1 // pred_check
      _
    $region11: #{tpu_custom_call.1} parent=1 // pred_check_branch
      %19 = sbr.rel (0) target = $region13
    $region12: #{tpu_custom_call.1} parent=1 // pred_region
      %s21 = ssub.s32 8192, 8192
      %22 = vsyncadd [#allocation3], %s21
      %s23 = sshll.u32 [#allocation2], 4
      %s24 = int_to_ptr.vmem [resolvable:$true] %s23
      %29 = dma.hbm_to_vmem [thread:$0]  %s2, 8192, %s24, [#allocation3], 512, 512, 32
    $region13: #{tpu_custom_call.1} parent=1 // pred_fallthru
      _
    // Predicated region
    $region14: #{tpu_custom_call.1} parent=1 // pred_check
      _
    $region15: #{tpu_custom_call.1} parent=1 // pred_check_branch
      %31 = sbr.rel (0) target = $region17
    $region16: #{tpu_custom_call.1} parent=1 // pred_region
      _
    $region17: #{tpu_custom_call.1} parent=1 // pred_fallthru
      _
    // Predicated region
    $region18: #{tpu_custom_call.1} parent=1 // pred_check
      _
    $region19: #{tpu_custom_call.1} parent=1 // pred_check_branch
      %33 = sbr.rel (0) target = $region21
    $region20: #{tpu_custom_call.1} parent=1 // pred_region
      %s35 = ssub.s32 2048, 2048
      %36 = vsyncadd [#allocation6], %s35
      %s37 = sshll.u32 [#allocation5], 4
      %s38 = int_to_ptr.vmem [resolvable:$true] %s37
      %43 = dma.hbm_to_vmem [thread:$0]  %s4, 2048, %s38, [#allocation6], 128, 128, 8
    $region21: #{tpu_custom_call.1} parent=1 // pred_fallthru
      _
    // Predicated region
    $region22: #{tpu_custom_call.1} parent=1 // pred_check
      _
    $region23: #{tpu_custom_call.1} parent=1 // pred_check_branch
      %45 = sbr.rel (0) target = $region25
    $region24: #{tpu_custom_call.1} parent=1 // pred_region
      _
    $region25: #{tpu_custom_call.1} parent=1 // pred_fallthru
      _
    // Predicated region
    $region26: #{tpu_custom_call.1} parent=1 // pred_check
      _
    $region27: #{tpu_custom_call.1} parent=1 // pred_check_branch
      %47 = sbr.rel (0) target = $region29
    $region28: #{tpu_custom_call.1} parent=1 // pred_region
      %48 = dma.done [#allocation3], 8192
    $region29: #{tpu_custom_call.1} parent=1 // pred_fallthru
      _
    // Predicated region
    $region30: #{tpu_custom_call.1} parent=1 // pred_check
      _
    $region31: #{tpu_custom_call.1} parent=1 // pred_check_branch
      %50 = sbr.rel (0) target = $region33
    $region32: #{tpu_custom_call.1} parent=1 // pred_region
      %51 = dma.done [#allocation6], 2048
    $region33: #{tpu_custom_call.1} parent=1 // pred_fallthru
      _
    %v52 = vld [vmem:[%s0] sm:$0xff]
    %v53 = vld [vmem:[%s1] sm:$0xf]
    %55 = vset.pattern.permute.xlu0 0
    %56 = vperm.xlu0 %55, %v52
    %v57 = vpop.permute.xlu0 %56
    %v60 = vlaneseq
    %v61 = vshrl.u32 %v60, 7
    %v62 = vsub.s32 0, %v61
    %v63 = vrot.slane %v53, %v62
    %v64 = vlaneseq
    %v65 = vshrl.u32 %v64, 7
    %v66 = vsub.s32 1, %v65
    %v67 = vrot.slane %v53, %v66
    %v68 = vlaneseq
    %v69 = vshrl.u32 %v68, 7
    %v70 = vsub.s32 2, %v69
    %v71 = vrot.slane %v53, %v70
    %v72 = vlaneseq
    %v73 = vshrl.u32 %v72, 7
    %v74 = vsub.s32 3, %v73
    %v75 = vrot.slane %v53, %v74
    %v80 = vmul.f32 %v57, %v63
    %v81 = vmul.f32 %v57, %v67
    %v82 = vmul.f32 %v57, %v71
    %v83 = vmul.f32 %v57, %v75
    %v84 = vld [vmem:[%s3] sm:$0xf]
    %v86 = vlaneseq
    %v87 = vshrl.u32 %v86, 7
    %v88 = vsub.s32 0, %v87
    %v89 = vrot.slane %v84, %v88
    %v90 = vlaneseq
    %v91 = vshrl.u32 %v90, 7
    %v92 = vsub.s32 1, %v91
    %v93 = vrot.slane %v84, %v92
    %v94 = vlaneseq
    %v95 = vshrl.u32 %v94, 7
    %v96 = vsub.s32 2, %v95
    %v97 = vrot.slane %v84, %v96
    %v98 = vlaneseq
    %v99 = vshrl.u32 %v98, 7
    %v100 = vsub.s32 3, %v99
    %v101 = vrot.slane %v84, %v100
    %v106 = vadd.f32 %v80, %v89
    %v107 = vadd.f32 %v81, %v93
    %v108 = vadd.f32 %v82, %v97
    %v109 = vadd.f32 %v83, %v101
    %v110 = vld [vmem:[#allocation2] sm:$0xff]
    %v111 = vld [vmem:[#allocation2 + $0x8] sm:$0xff]
    %v112 = vld [vmem:[#allocation2 + $0x10] sm:$0xff]
    %v113 = vld [vmem:[#allocation2 + $0x18] sm:$0xff]
    %v114 = vld [vmem:[#allocation2 + $0x20] sm:$0xff]
    %v115 = vld [vmem:[#allocation2 + $0x28] sm:$0xff]
    %v116 = vld [vmem:[#allocation2 + $0x30] sm:$0xff]
    %v117 = vld [vmem:[#allocation2 + $0x38] sm:$0xff]
    %v118 = vld [vmem:[#allocation2 + $0x40] sm:$0xff]
    %v119 = vld [vmem:[#allocation2 + $0x48] sm:$0xff]
    %v120 = vld [vmem:[#allocation2 + $0x50] sm:$0xff]
    %v121 = vld [vmem:[#allocation2 + $0x58] sm:$0xff]
    %v122 = vld [vmem:[#allocation2 + $0x60] sm:$0xff]
    %v123 = vld [vmem:[#allocation2 + $0x68] sm:$0xff]
    %v124 = vld [vmem:[#allocation2 + $0x70] sm:$0xff]
    %v125 = vld [vmem:[#allocation2 + $0x78] sm:$0xff]
    %v126 = vld [vmem:[#allocation2 + $0x80] sm:$0xff]
    %v127 = vld [vmem:[#allocation2 + $0x88] sm:$0xff]
    %v128 = vld [vmem:[#allocation2 + $0x90] sm:$0xff]
    %v129 = vld [vmem:[#allocation2 + $0x98] sm:$0xff]
    %v130 = vld [vmem:[#allocation2 + $0xa0] sm:$0xff]
    %v131 = vld [vmem:[#allocation2 + $0xa8] sm:$0xff]
    %v132 = vld [vmem:[#allocation2 + $0xb0] sm:$0xff]
    %v133 = vld [vmem:[#allocation2 + $0xb8] sm:$0xff]
    %v134 = vld [vmem:[#allocation2 + $0xc0] sm:$0xff]
    %v135 = vld [vmem:[#allocation2 + $0xc8] sm:$0xff]
    %v136 = vld [vmem:[#allocation2 + $0xd0] sm:$0xff]
    %v137 = vld [vmem:[#allocation2 + $0xd8] sm:$0xff]
    %v138 = vld [vmem:[#allocation2 + $0xe0] sm:$0xff]
    %v139 = vld [vmem:[#allocation2 + $0xe8] sm:$0xff]
    %v140 = vld [vmem:[#allocation2 + $0xf0] sm:$0xff]
    %v141 = vld [vmem:[#allocation2 + $0xf8] sm:$0xff]
    %v142 = vld [vmem:[#allocation2 + $0x100] sm:$0xff]
    %v143 = vld [vmem:[#allocation2 + $0x108] sm:$0xff]
    %v144 = vld [vmem:[#allocation2 + $0x110] sm:$0xff]
    %v145 = vld [vmem:[#allocation2 + $0x118] sm:$0xff]
    %v146 = vld [vmem:[#allocation2 + $0x120] sm:$0xff]
    %v147 = vld [vmem:[#allocation2 + $0x128] sm:$0xff]
    %v148 = vld [vmem:[#allocation2 + $0x130] sm:$0xff]
    %v149 = vld [vmem:[#allocation2 + $0x138] sm:$0xff]
    %v150 = vld [vmem:[#allocation2 + $0x140] sm:$0xff]
    %v151 = vld [vmem:[#allocation2 + $0x148] sm:$0xff]
    %v152 = vld [vmem:[#allocation2 + $0x150] sm:$0xff]
    %v153 = vld [vmem:[#allocation2 + $0x158] sm:$0xff]
    %v154 = vld [vmem:[#allocation2 + $0x160] sm:$0xff]
    %v155 = vld [vmem:[#allocation2 + $0x168] sm:$0xff]
    %v156 = vld [vmem:[#allocation2 + $0x170] sm:$0xff]
    %v157 = vld [vmem:[#allocation2 + $0x178] sm:$0xff]
    %v158 = vld [vmem:[#allocation2 + $0x180] sm:$0xff]
    %v159 = vld [vmem:[#allocation2 + $0x188] sm:$0xff]
    %v160 = vld [vmem:[#allocation2 + $0x190] sm:$0xff]
    %v161 = vld [vmem:[#allocation2 + $0x198] sm:$0xff]
    %v162 = vld [vmem:[#allocation2 + $0x1a0] sm:$0xff]
    %v163 = vld [vmem:[#allocation2 + $0x1a8] sm:$0xff]
    %v164 = vld [vmem:[#allocation2 + $0x1b0] sm:$0xff]
    %v165 = vld [vmem:[#allocation2 + $0x1b8] sm:$0xff]
    %v166 = vld [vmem:[#allocation2 + $0x1c0] sm:$0xff]
    %v167 = vld [vmem:[#allocation2 + $0x1c8] sm:$0xff]
    %v168 = vld [vmem:[#allocation2 + $0x1d0] sm:$0xff]
    %v169 = vld [vmem:[#allocation2 + $0x1d8] sm:$0xff]
    %v170 = vld [vmem:[#allocation2 + $0x1e0] sm:$0xff]
    %v171 = vld [vmem:[#allocation2 + $0x1e8] sm:$0xff]
    %v172 = vld [vmem:[#allocation2 + $0x1f0] sm:$0xff]
    %v173 = vld [vmem:[#allocation2 + $0x1f8] sm:$0xff]
    %174 = vmatprep.subr.mxu0 %v111
    %175 = vmatpush1.msra.mxu0 %v110
    %176 = vmatprep.subr.mxu0 %v115
    %177 = vmatpush1.msra.mxu0 %v114
    %178 = vmatprep.subr.mxu0 %v119
    %179 = vmatpush1.msra.mxu0 %v118
    %180 = vmatprep.subr.mxu0 %v123
    %181 = vmatpush1.msra.mxu0 %v122
    %182 = vmatprep.subr.mxu0 %v127
    %183 = vmatpush1.msra.mxu0 %v126
    %184 = vmatprep.subr.mxu0 %v131
    %185 = vmatpush1.msra.mxu0 %v130
    %186 = vmatprep.subr.mxu0 %v135
    %187 = vmatpush1.msra.mxu0 %v134
    %188 = vmatprep.subr.mxu0 %v139
    %189 = vmatpush1.msra.mxu0 %v138
    %190 = vmatprep.subr.mxu0 %v143
    %191 = vmatpush1.msra.mxu0 %v142
    %192 = vmatprep.subr.mxu0 %v147
    %193 = vmatpush1.msra.mxu0 %v146
    %194 = vmatprep.subr.mxu0 %v151
    %195 = vmatpush1.msra.mxu0 %v150
    %196 = vmatprep.subr.mxu0 %v155
    %197 = vmatpush1.msra.mxu0 %v154
    %198 = vmatprep.subr.mxu0 %v159
    %199 = vmatpush1.msra.mxu0 %v158
    %200 = vmatprep.subr.mxu0 %v163
    %201 = vmatpush1.msra.mxu0 %v162
    %202 = vmatprep.subr.mxu0 %v167
    %203 = vmatpush1.msra.mxu0 %v166
    %204 = vmatprep.subr.mxu0 %v171
    %205 = vmatpush1.msra.mxu0 %v170
    %206 = vmatprep.subr.mxu0 0.0
    %207 = vmatpush1.msra.mxu0 0.0
    %208 = vmatprep.subr.mxu0 0.0
    %209 = vmatpush1.msra.mxu0 0.0
    %210 = vmatprep.subr.mxu0 0.0
    %211 = vmatpush1.msra.mxu0 0.0
    %212 = vmatprep.subr.mxu0 0.0
    %213 = vmatpush1.msra.mxu0 0.0
    %214 = vmatprep.subr.mxu0 0.0
    %215 = vmatpush1.msra.mxu0 0.0
    %216 = vmatprep.subr.mxu0 0.0
    %217 = vmatpush1.msra.mxu0 0.0
    %218 = vmatprep.subr.mxu0 0.0
    %219 = vmatpush1.msra.mxu0 0.0
    %220 = vmatprep.subr.mxu0 0.0
    %221 = vmatpush1.msra.mxu0 0.0
    %222 = vmatprep.subr.mxu0 0.0
    %223 = vmatpush1.msra.mxu0 0.0
    %224 = vmatprep.subr.mxu0 0.0
    %225 = vmatpush1.msra.mxu0 0.0
    %226 = vmatprep.subr.mxu0 0.0
    %227 = vmatpush1.msra.mxu0 0.0
    %228 = vmatprep.subr.mxu0 0.0
    %229 = vmatpush1.msra.mxu0 0.0
    %230 = vmatprep.subr.mxu0 0.0
    %231 = vmatpush1.msra.mxu0 0.0
    %232 = vmatprep.subr.mxu0 0.0
    %233 = vmatpush1.msra.mxu0 0.0
    %234 = vmatprep.subr.mxu0 0.0
    %235 = vmatpush1.msra.mxu0 0.0
    %236 = vmatprep.subr.mxu0 0.0
    %237 = vmatpush1.msra.mxu0 0.0
    %238 = vmatprep.mubr.f32.mxu0 0.0
    %239 = vmatmul.mubr.f32.gmra.mrb[0].mxu0 0.0
    %v240 = vpop.f32.mrb[0].mxu0
    %v241 = vadd.f32 0.0, %v240
    %v242 = vpop.f32.mrb[0].mxu0
    %v243 = vadd.f32 0.0, %v242
    %244 = vdwg.mxu0
    %245 = vmatprep.subr.mxu0 %v113
    %246 = vmatpush1.msra.mxu0 %v112
    %247 = vmatprep.subr.mxu0 %v117
    %248 = vmatpush1.msra.mxu0 %v116
    %249 = vmatprep.subr.mxu0 %v121
    %250 = vmatpush1.msra.mxu0 %v120
    %251 = vmatprep.subr.mxu0 %v125
    %252 = vmatpush1.msra.mxu0 %v124
    %253 = vmatprep.subr.mxu0 %v129
    %254 = vmatpush1.msra.mxu0 %v128
    %255 = vmatprep.subr.mxu0 %v133
    %256 = vmatpush1.msra.mxu0 %v132
    %257 = vmatprep.subr.mxu0 %v137
    %258 = vmatpush1.msra.mxu0 %v136
    %259 = vmatprep.subr.mxu0 %v141
    %260 = vmatpush1.msra.mxu0 %v140
    %261 = vmatprep.subr.mxu0 %v145
    %262 = vmatpush1.msra.mxu0 %v144
    %263 = vmatprep.subr.mxu0 %v149
    %264 = vmatpush1.msra.mxu0 %v148
    %265 = vmatprep.subr.mxu0 %v153
    %266 = vmatpush1.msra.mxu0 %v152
    %267 = vmatprep.subr.mxu0 %v157
    %268 = vmatpush1.msra.mxu0 %v156
    %269 = vmatprep.subr.mxu0 %v161
    %270 = vmatpush1.msra.mxu0 %v160
    %271 = vmatprep.subr.mxu0 %v165
    %272 = vmatpush1.msra.mxu0 %v164
    %273 = vmatprep.subr.mxu0 %v169
    %274 = vmatpush1.msra.mxu0 %v168
    %275 = vmatprep.subr.mxu0 %v173
    %276 = vmatpush1.msra.mxu0 %v172
    %277 = vmatprep.subr.mxu0 0.0
    %278 = vmatpush1.msra.mxu0 0.0
    %279 = vmatprep.subr.mxu0 0.0
    %280 = vmatpush1.msra.mxu0 0.0
    %281 = vmatprep.subr.mxu0 0.0
    %282 = vmatpush1.msra.mxu0 0.0
    %283 = vmatprep.subr.mxu0 0.0
    %284 = vmatpush1.msra.mxu0 0.0
    %285 = vmatprep.subr.mxu0 0.0
    %286 = vmatpush1.msra.mxu0 0.0
    %287 = vmatprep.subr.mxu0 0.0
    %288 = vmatpush1.msra.mxu0 0.0
    %289 = vmatprep.subr.mxu0 0.0
    %290 = vmatpush1.msra.mxu0 0.0
    %291 = vmatprep.subr.mxu0 0.0
    %292 = vmatpush1.msra.mxu0 0.0
    %293 = vmatprep.subr.mxu0 0.0
    %294 = vmatpush1.msra.mxu0 0.0
    %295 = vmatprep.subr.mxu0 0.0
    %296 = vmatpush1.msra.mxu0 0.0
    %297 = vmatprep.subr.mxu0 0.0
    %298 = vmatpush1.msra.mxu0 0.0
    %299 = vmatprep.subr.mxu0 0.0
    %300 = vmatpush1.msra.mxu0 0.0
    %301 = vmatprep.subr.mxu0 0.0
    %302 = vmatpush1.msra.mxu0 0.0
    %303 = vmatprep.subr.mxu0 0.0
    %304 = vmatpush1.msra.mxu0 0.0
    %305 = vmatprep.subr.mxu0 0.0
    %306 = vmatpush1.msra.mxu0 0.0
    %307 = vmatprep.subr.mxu0 0.0
    %308 = vmatpush1.msra.mxu0 0.0
    %309 = vmatprep.mubr.f32.mxu0 0.0
    %310 = vmatmul.mubr.f32.gmra.mrb[0].mxu0 0.0
    %v311 = vpop.f32.mrb[0].mxu0
    %v312 = vadd.f32 0.0, %v311
    %v313 = vpop.f32.mrb[0].mxu0
    %v314 = vadd.f32 0.0, %v313
    %315 = vdwg.mxu0
    %v316 = vadd.f32 %v106, %v241
    %v317 = vadd.f32 %v107, %v243
    %v318 = vadd.f32 %v108, %v312
    %v319 = vadd.f32 %v109, %v314
    %v320 = vxor.u32 %v316, 2147483648
    %v321 = vxor.u32 %v317, 2147483648
    %v322 = vxor.u32 %v319, 2147483648
    %v323 = vmul.f32 %v320, 1.442695
    %v324 = vpow.pop %v323
    %v325 = vmul.f32 %v321, 1.442695
    %v326 = vpow.pop %v325
    %v327 = vmul.f32 %v322, 1.442695
    %v328 = vpow.pop %v327
    %v329 = vadd.f32 %v324, 1.0
    %v330 = vadd.f32 %v326, 1.0
    %v331 = vadd.f32 %v328, 1.0
    %v332 = vrcp.pop %v329
    %v333 = vmul.f32 1.0, %v332
    %v334 = vrcp.pop %v330
    %v335 = vmul.f32 1.0, %v334
    %v336 = vrcp.pop %v331
    %v337 = vmul.f32 1.0, %v336
    %v338 = vtanh.pop %v318
    %v339 = vmul.f32 %v335, 0.0
    %v340 = vmul.f32 %v333, %v338
    %v341 = vadd.f32 %v339, %v340
    %v342 = vtanh.pop %v341
    %v343 = vmul.f32 %v337, %v342
    %344 = vmatprep.subr.mxu0 %v111
    %345 = vmatpush1.msra.mxu0 %v110
    %346 = vmatprep.subr.mxu0 %v115
    %347 = vmatpush1.msra.mxu0 %v114
    %348 = vmatprep.subr.mxu0 %v119
    %349 = vmatpush1.msra.mxu0 %v118
    %350 = vmatprep.subr.mxu0 %v123
    %351 = vmatpush1.msra.mxu0 %v122
    %352 = vmatprep.subr.mxu0 %v127
    %353 = vmatpush1.msra.mxu0 %v126
    %354 = vmatprep.subr.mxu0 %v131
    %355 = vmatpush1.msra.mxu0 %v130
    %356 = vmatprep.subr.mxu0 %v135
    %357 = vmatpush1.msra.mxu0 %v134
    %358 = vmatprep.subr.mxu0 %v139
    %359 = vmatpush1.msra.mxu0 %v138
    %360 = vmatprep.subr.mxu0 %v143
    %361 = vmatpush1.msra.mxu0 %v142
    %362 = vmatprep.subr.mxu0 %v147
    %363 = vmatpush1.msra.mxu0 %v146
    %364 = vmatprep.subr.mxu0 %v151
    %365 = vmatpush1.msra.mxu0 %v150
    %366 = vmatprep.subr.mxu0 %v155
    %367 = vmatpush1.msra.mxu0 %v154
    %368 = vmatprep.subr.mxu0 %v159
    %369 = vmatpush1.msra.mxu0 %v158
    %370 = vmatprep.subr.mxu0 %v163
    %371 = vmatpush1.msra.mxu0 %v162
    %372 = vmatprep.subr.mxu0 %v167
    %373 = vmatpush1.msra.mxu0 %v166
    %374 = vmatprep.subr.mxu0 %v171
    %375 = vmatpush1.msra.mxu0 %v170
    %376 = vmatprep.subr.mxu0 0.0
    %377 = vmatpush1.msra.mxu0 0.0
    %378 = vmatprep.subr.mxu0 0.0
    %379 = vmatpush1.msra.mxu0 0.0
    %380 = vmatprep.subr.mxu0 0.0
    %381 = vmatpush1.msra.mxu0 0.0
    %382 = vmatprep.subr.mxu0 0.0
    %383 = vmatpush1.msra.mxu0 0.0
    %384 = vmatprep.subr.mxu0 0.0
    %385 = vmatpush1.msra.mxu0 0.0
    %386 = vmatprep.subr.mxu0 0.0
    %387 = vmatpush1.msra.mxu0 0.0
    %388 = vmatprep.subr.mxu0 0.0
    %389 = vmatpush1.msra.mxu0 0.0
    %390 = vmatprep.subr.mxu0 0.0
    %391 = vmatpush1.msra.mxu0 0.0
    %392 = vmatprep.subr.mxu0 0.0
    %393 = vmatpush1.msra.mxu0 0.0
    %394 = vmatprep.subr.mxu0 0.0
    %395 = vmatpush1.msra.mxu0 0.0
    %396 = vmatprep.subr.mxu0 0.0
    %397 = vmatpush1.msra.mxu0 0.0
    %398 = vmatprep.subr.mxu0 0.0
    %399 = vmatpush1.msra.mxu0 0.0
    %400 = vmatprep.subr.mxu0 0.0
    %401 = vmatpush1.msra.mxu0 0.0
    %402 = vmatprep.subr.mxu0 0.0
    %403 = vmatpush1.msra.mxu0 0.0
    %404 = vmatprep.subr.mxu0 0.0
    %405 = vmatpush1.msra.mxu0 0.0
    %406 = vmatprep.subr.mxu0 0.0
    %407 = vmatpush1.msra.mxu0 0.0
    %408 = vmatprep.mubr.f32.mxu0 0.0
    %409 = vmatmul.mubr.f32.gmra.mrb[0].mxu0 %v343
    %v410 = vpop.f32.mrb[0].mxu0
    %v411 = vadd.f32 0.0, %v410
    %v412 = vpop.f32.mrb[0].mxu0
    %v413 = vadd.f32 0.0, %v412
    %414 = vdwg.mxu0
    %415 = vmatprep.subr.mxu0 %v113
    %416 = vmatpush1.msra.mxu0 %v112
    %417 = vmatprep.subr.mxu0 %v117
    %418 = vmatpush1.msra.mxu0 %v116
    %419 = vmatprep.subr.mxu0 %v121
    %420 = vmatpush1.msra.mxu0 %v120
    %421 = vmatprep.subr.mxu0 %v125
    %422 = vmatpush1.msra.mxu0 %v124
    %423 = vmatprep.subr.mxu0 %v129
    %424 = vmatpush1.msra.mxu0 %v128
    %425 = vmatprep.subr.mxu0 %v133
    %426 = vmatpush1.msra.mxu0 %v132
    %427 = vmatprep.subr.mxu0 %v137
    %428 = vmatpush1.msra.mxu0 %v136
    %429 = vmatprep.subr.mxu0 %v141
    %430 = vmatpush1.msra.mxu0 %v140
    %431 = vmatprep.subr.mxu0 %v145
    %432 = vmatpush1.msra.mxu0 %v144
    %433 = vmatprep.subr.mxu0 %v149
    %434 = vmatpush1.msra.mxu0 %v148
    %435 = vmatprep.subr.mxu0 %v153
    %436 = vmatpush1.msra.mxu0 %v152
    %437 = vmatprep.subr.mxu0 %v157
    %438 = vmatpush1.msra.mxu0 %v156
    %439 = vmatprep.subr.mxu0 %v161
    %440 = vmatpush1.msra.mxu0 %v160
    %441 = vmatprep.subr.mxu0 %v165
    %442 = vmatpush1.msra.mxu0 %v164
    %443 = vmatprep.subr.mxu0 %v169
    %444 = vmatpush1.msra.mxu0 %v168
    %445 = vmatprep.subr.mxu0 %v173
    %446 = vmatpush1.msra.mxu0 %v172
    %447 = vmatprep.subr.mxu0 0.0
    %448 = vmatpush1.msra.mxu0 0.0
    %449 = vmatprep.subr.mxu0 0.0
    %450 = vmatpush1.msra.mxu0 0.0
    %451 = vmatprep.subr.mxu0 0.0
    %452 = vmatpush1.msra.mxu0 0.0
    %453 = vmatprep.subr.mxu0 0.0
    %454 = vmatpush1.msra.mxu0 0.0
    %455 = vmatprep.subr.mxu0 0.0
    %456 = vmatpush1.msra.mxu0 0.0
    %457 = vmatprep.subr.mxu0 0.0
    %458 = vmatpush1.msra.mxu0 0.0
    %459 = vmatprep.subr.mxu0 0.0
    %460 = vmatpush1.msra.mxu0 0.0
    %461 = vmatprep.subr.mxu0 0.0
    %462 = vmatpush1.msra.mxu0 0.0
    %463 = vmatprep.subr.mxu0 0.0
    %464 = vmatpush1.msra.mxu0 0.0
    %465 = vmatprep.subr.mxu0 0.0
    %466 = vmatpush1.msra.mxu0 0.0
    %467 = vmatprep.subr.mxu0 0.0
    %468 = vmatpush1.msra.mxu0 0.0
    %469 = vmatprep.subr.mxu0 0.0
    %470 = vmatpush1.msra.mxu0 0.0
    %471 = vmatprep.subr.mxu0 0.0
    %472 = vmatpush1.msra.mxu0 0.0
    %473 = vmatprep.subr.mxu0 0.0
    %474 = vmatpush1.msra.mxu0 0.0
    %475 = vmatprep.subr.mxu0 0.0
    %476 = vmatpush1.msra.mxu0 0.0
    %477 = vmatprep.subr.mxu0 0.0
    %478 = vmatpush1.msra.mxu0 0.0
    %479 = vmatprep.mubr.f32.mxu0 0.0
    %480 = vmatmul.mubr.f32.gmra.mrb[0].mxu0 %v343
    %v481 = vpop.f32.mrb[0].mxu0
    %v482 = vadd.f32 0.0, %v481
    %v483 = vpop.f32.mrb[0].mxu0
    %v484 = vadd.f32 0.0, %v483
    %485 = vdwg.mxu0
    %v490 = vrot.slane %v411, 7
    %v491 = vrot.slane %v413, 7
    %v492 = vrot.slane %v482, 7
    %v493 = vrot.slane %v484, 7
    %v498 = vadd.f32 %v106, %v490
    %v499 = vadd.f32 %v107, %v491
    %v500 = vadd.f32 %v108, %v492
    %v501 = vadd.f32 %v109, %v493
    %v502 = vxor.u32 %v498, 2147483648
    %v503 = vxor.u32 %v499, 2147483648
    %v504 = vxor.u32 %v501, 2147483648
    %v505 = vmul.f32 %v502, 1.442695
    %v506 = vpow.pop %v505
    %v507 = vmul.f32 %v503, 1.442695
    %v508 = vpow.pop %v507
    %v509 = vmul.f32 %v504, 1.442695
    %v510 = vpow.pop %v509
    %v511 = vadd.f32 %v506, 1.0
    %v512 = vadd.f32 %v508, 1.0
    %v513 = vadd.f32 %v510, 1.0
    %v514 = vrcp.pop %v511
    %v515 = vmul.f32 1.0, %v514
    %v516 = vrcp.pop %v512
    %v517 = vmul.f32 1.0, %v516
    %v518 = vrcp.pop %v513
    %v519 = vmul.f32 1.0, %v518
    %v520 = vtanh.pop %v500
    %v522 = vrot.slane %v341, 7
    %v524 = vmul.f32 %v517, %v522
    %v525 = vmul.f32 %v515, %v520
    %v526 = vadd.f32 %v524, %v525
    %v527 = vtanh.pop %v526
    %v528 = vmul.f32 %v519, %v527
    %v530 = vrot.slane %v528, 1
    %532 = vmatprep.subr.mxu0 %v111
    %533 = vmatpush1.msra.mxu0 %v110
    %534 = vmatprep.subr.mxu0 %v115
    %535 = vmatpush1.msra.mxu0 %v114
    %536 = vmatprep.subr.mxu0 %v119
    %537 = vmatpush1.msra.mxu0 %v118
    %538 = vmatprep.subr.mxu0 %v123
    %539 = vmatpush1.msra.mxu0 %v122
    %540 = vmatprep.subr.mxu0 %v127
    %541 = vmatpush1.msra.mxu0 %v126
    %542 = vmatprep.subr.mxu0 %v131
    %543 = vmatpush1.msra.mxu0 %v130
    %544 = vmatprep.subr.mxu0 %v135
    %545 = vmatpush1.msra.mxu0 %v134
    %546 = vmatprep.subr.mxu0 %v139
    %547 = vmatpush1.msra.mxu0 %v138
    %548 = vmatprep.subr.mxu0 %v143
    %549 = vmatpush1.msra.mxu0 %v142
    %550 = vmatprep.subr.mxu0 %v147
    %551 = vmatpush1.msra.mxu0 %v146
    %552 = vmatprep.subr.mxu0 %v151
    %553 = vmatpush1.msra.mxu0 %v150
    %554 = vmatprep.subr.mxu0 %v155
    %555 = vmatpush1.msra.mxu0 %v154
    %556 = vmatprep.subr.mxu0 %v159
    %557 = vmatpush1.msra.mxu0 %v158
    %558 = vmatprep.subr.mxu0 %v163
    %559 = vmatpush1.msra.mxu0 %v162
    %560 = vmatprep.subr.mxu0 %v167
    %561 = vmatpush1.msra.mxu0 %v166
    %562 = vmatprep.subr.mxu0 %v171
    %563 = vmatpush1.msra.mxu0 %v170
    %564 = vmatprep.subr.mxu0 0.0
    %565 = vmatpush1.msra.mxu0 0.0
    %566 = vmatprep.subr.mxu0 0.0
    %567 = vmatpush1.msra.mxu0 0.0
    %568 = vmatprep.subr.mxu0 0.0
    %569 = vmatpush1.msra.mxu0 0.0
    %570 = vmatprep.subr.mxu0 0.0
    %571 = vmatpush1.msra.mxu0 0.0
    %572 = vmatprep.subr.mxu0 0.0
    %573 = vmatpush1.msra.mxu0 0.0
    %574 = vmatprep.subr.mxu0 0.0
    %575 = vmatpush1.msra.mxu0 0.0
    %576 = vmatprep.subr.mxu0 0.0
    %577 = vmatpush1.msra.mxu0 0.0
    %578 = vmatprep.subr.mxu0 0.0
    %579 = vmatpush1.msra.mxu0 0.0
    %580 = vmatprep.subr.mxu0 0.0
    %581 = vmatpush1.msra.mxu0 0.0
    %582 = vmatprep.subr.mxu0 0.0
    %583 = vmatpush1.msra.mxu0 0.0
    %584 = vmatprep.subr.mxu0 0.0
    %585 = vmatpush1.msra.mxu0 0.0
    %586 = vmatprep.subr.mxu0 0.0
    %587 = vmatpush1.msra.mxu0 0.0
    %588 = vmatprep.subr.mxu0 0.0
    %589 = vmatpush1.msra.mxu0 0.0
    %590 = vmatprep.subr.mxu0 0.0
    %591 = vmatpush1.msra.mxu0 0.0
    %592 = vmatprep.subr.mxu0 0.0
    %593 = vmatpush1.msra.mxu0 0.0
    %594 = vmatprep.subr.mxu0 0.0
    %595 = vmatpush1.msra.mxu0 0.0
    %596 = vmatprep.mubr.f32.mxu0 0.0
    %597 = vmatmul.mubr.f32.gmra.mrb[0].mxu0 %v530
    %v598 = vpop.f32.mrb[0].mxu0
    %v599 = vadd.f32 0.0, %v598
    %v600 = vpop.f32.mrb[0].mxu0
    %v601 = vadd.f32 0.0, %v600
    %602 = vdwg.mxu0
    %603 = vmatprep.subr.mxu0 %v113
    %604 = vmatpush1.msra.mxu0 %v112
    %605 = vmatprep.subr.mxu0 %v117
    %606 = vmatpush1.msra.mxu0 %v116
    %607 = vmatprep.subr.mxu0 %v121
    %608 = vmatpush1.msra.mxu0 %v120
    %609 = vmatprep.subr.mxu0 %v125
    %610 = vmatpush1.msra.mxu0 %v124
    %611 = vmatprep.subr.mxu0 %v129
    %612 = vmatpush1.msra.mxu0 %v128
    %613 = vmatprep.subr.mxu0 %v133
    %614 = vmatpush1.msra.mxu0 %v132
    %615 = vmatprep.subr.mxu0 %v137
    %616 = vmatpush1.msra.mxu0 %v136
    %617 = vmatprep.subr.mxu0 %v141
    %618 = vmatpush1.msra.mxu0 %v140
    %619 = vmatprep.subr.mxu0 %v145
    %620 = vmatpush1.msra.mxu0 %v144
    %621 = vmatprep.subr.mxu0 %v149
    %622 = vmatpush1.msra.mxu0 %v148
    %623 = vmatprep.subr.mxu0 %v153
    %624 = vmatpush1.msra.mxu0 %v152
    %625 = vmatprep.subr.mxu0 %v157
    %626 = vmatpush1.msra.mxu0 %v156
    %627 = vmatprep.subr.mxu0 %v161
    %628 = vmatpush1.msra.mxu0 %v160
    %629 = vmatprep.subr.mxu0 %v165
    %630 = vmatpush1.msra.mxu0 %v164
    %631 = vmatprep.subr.mxu0 %v169
    %632 = vmatpush1.msra.mxu0 %v168
    %633 = vmatprep.subr.mxu0 %v173
    %634 = vmatpush1.msra.mxu0 %v172
    %635 = vmatprep.subr.mxu0 0.0
    %636 = vmatpush1.msra.mxu0 0.0
    %637 = vmatprep.subr.mxu0 0.0
    %638 = vmatpush1.msra.mxu0 0.0
    %639 = vmatprep.subr.mxu0 0.0
    %640 = vmatpush1.msra.mxu0 0.0
    %641 = vmatprep.subr.mxu0 0.0
    %642 = vmatpush1.msra.mxu0 0.0
    %643 = vmatprep.subr.mxu0 0.0
    %644 = vmatpush1.msra.mxu0 0.0
    %645 = vmatprep.subr.mxu0 0.0
    %646 = vmatpush1.msra.mxu0 0.0
    %647 = vmatprep.subr.mxu0 0.0
    %648 = vmatpush1.msra.mxu0 0.0
    %649 = vmatprep.subr.mxu0 0.0
    %650 = vmatpush1.msra.mxu0 0.0
    %651 = vmatprep.subr.mxu0 0.0
    %652 = vmatpush1.msra.mxu0 0.0
    %653 = vmatprep.subr.mxu0 0.0
    %654 = vmatpush1.msra.mxu0 0.0
    %655 = vmatprep.subr.mxu0 0.0
    %656 = vmatpush1.msra.mxu0 0.0
    %657 = vmatprep.subr.mxu0 0.0
    %658 = vmatpush1.msra.mxu0 0.0
    %659 = vmatprep.subr.mxu0 0.0
    %660 = vmatpush1.msra.mxu0 0.0
    %661 = vmatprep.subr.mxu0 0.0
    %662 = vmatpush1.msra.mxu0 0.0
    %663 = vmatprep.subr.mxu0 0.0
    %664 = vmatpush1.msra.mxu0 0.0
    %665 = vmatprep.subr.mxu0 0.0
    %666 = vmatpush1.msra.mxu0 0.0
    %667 = vmatprep.mubr.f32.mxu0 0.0
    %668 = vmatmul.mubr.f32.gmra.mrb[0].mxu0 %v530
    %v669 = vpop.f32.mrb[0].mxu0
    %v670 = vadd.f32 0.0, %v669
    %v671 = vpop.f32.mrb[0].mxu0
    %v672 = vadd.f32 0.0, %v671
    %673 = vdwg.mxu0
    %v678 = vrot.slane %v599, 6
    %v679 = vrot.slane %v601, 6
    %v680 = vrot.slane %v670, 6
    %v681 = vrot.slane %v672, 6
    %v686 = vadd.f32 %v106, %v678
    %v687 = vadd.f32 %v107, %v679
    %v688 = vadd.f32 %v108, %v680
    %v689 = vadd.f32 %v109, %v681
    %v690 = vxor.u32 %v686, 2147483648
    %v691 = vxor.u32 %v687, 2147483648
    %v692 = vxor.u32 %v689, 2147483648
    %v693 = vmul.f32 %v690, 1.442695
    %v694 = vpow.pop %v693
    %v695 = vmul.f32 %v691, 1.442695
    %v696 = vpow.pop %v695
    %v697 = vmul.f32 %v692, 1.442695
    %v698 = vpow.pop %v697
    %v699 = vadd.f32 %v694, 1.0
    %v700 = vadd.f32 %v696, 1.0
    %v701 = vadd.f32 %v698, 1.0
    %v702 = vrcp.pop %v699
    %v703 = vmul.f32 1.0, %v702
    %v704 = vrcp.pop %v700
    %v705 = vmul.f32 1.0, %v704
    %v706 = vrcp.pop %v701
    %v707 = vmul.f32 1.0, %v706
    %v708 = vtanh.pop %v688
    %v710 = vrot.slane %v526, 7
    %v712 = vmul.f32 %v705, %v710
    %v713 = vmul.f32 %v703, %v708
    %v714 = vadd.f32 %v712, %v713
    %v715 = vtanh.pop %v714
    %v716 = vmul.f32 %v707, %v715
    %v718 = vrot.slane %v716, 2
    %720 = vmatprep.subr.mxu0 %v111
    %721 = vmatpush1.msra.mxu0 %v110
    %722 = vmatprep.subr.mxu0 %v115
    %723 = vmatpush1.msra.mxu0 %v114
    %724 = vmatprep.subr.mxu0 %v119
    %725 = vmatpush1.msra.mxu0 %v118
    %726 = vmatprep.subr.mxu0 %v123
    %727 = vmatpush1.msra.mxu0 %v122
    %728 = vmatprep.subr.mxu0 %v127
    %729 = vmatpush1.msra.mxu0 %v126
    %730 = vmatprep.subr.mxu0 %v131
    %731 = vmatpush1.msra.mxu0 %v130
    %732 = vmatprep.subr.mxu0 %v135
    %733 = vmatpush1.msra.mxu0 %v134
    %734 = vmatprep.subr.mxu0 %v139
    %735 = vmatpush1.msra.mxu0 %v138
    %736 = vmatprep.subr.mxu0 %v143
    %737 = vmatpush1.msra.mxu0 %v142
    %738 = vmatprep.subr.mxu0 %v147
    %739 = vmatpush1.msra.mxu0 %v146
    %740 = vmatprep.subr.mxu0 %v151
    %741 = vmatpush1.msra.mxu0 %v150
    %742 = vmatprep.subr.mxu0 %v155
    %743 = vmatpush1.msra.mxu0 %v154
    %744 = vmatprep.subr.mxu0 %v159
    %745 = vmatpush1.msra.mxu0 %v158
    %746 = vmatprep.subr.mxu0 %v163
    %747 = vmatpush1.msra.mxu0 %v162
    %748 = vmatprep.subr.mxu0 %v167
    %749 = vmatpush1.msra.mxu0 %v166
    %750 = vmatprep.subr.mxu0 %v171
    %751 = vmatpush1.msra.mxu0 %v170
    %752 = vmatprep.subr.mxu0 0.0
    %753 = vmatpush1.msra.mxu0 0.0
    %754 = vmatprep.subr.mxu0 0.0
    %755 = vmatpush1.msra.mxu0 0.0
    %756 = vmatprep.subr.mxu0 0.0
    %757 = vmatpush1.msra.mxu0 0.0
    %758 = vmatprep.subr.mxu0 0.0
    %759 = vmatpush1.msra.mxu0 0.0
    %760 = vmatprep.subr.mxu0 0.0
    %761 = vmatpush1.msra.mxu0 0.0
    %762 = vmatprep.subr.mxu0 0.0
    %763 = vmatpush1.msra.mxu0 0.0
    %764 = vmatprep.subr.mxu0 0.0
    %765 = vmatpush1.msra.mxu0 0.0
    %766 = vmatprep.subr.mxu0 0.0
    %767 = vmatpush1.msra.mxu0 0.0
    %768 = vmatprep.subr.mxu0 0.0
    %769 = vmatpush1.msra.mxu0 0.0
    %770 = vmatprep.subr.mxu0 0.0
    %771 = vmatpush1.msra.mxu0 0.0
    %772 = vmatprep.subr.mxu0 0.0
    %773 = vmatpush1.msra.mxu0 0.0
    %774 = vmatprep.subr.mxu0 0.0
    %775 = vmatpush1.msra.mxu0 0.0
    %776 = vmatprep.subr.mxu0 0.0
    %777 = vmatpush1.msra.mxu0 0.0
    %778 = vmatprep.subr.mxu0 0.0
    %779 = vmatpush1.msra.mxu0 0.0
    %780 = vmatprep.subr.mxu0 0.0
    %781 = vmatpush1.msra.mxu0 0.0
    %782 = vmatprep.subr.mxu0 0.0
    %783 = vmatpush1.msra.mxu0 0.0
    %784 = vmatprep.mubr.f32.mxu0 0.0
    %785 = vmatmul.mubr.f32.gmra.mrb[0].mxu0 %v718
    %v786 = vpop.f32.mrb[0].mxu0
    %v787 = vadd.f32 0.0, %v786
    %v788 = vpop.f32.mrb[0].mxu0
    %v789 = vadd.f32 0.0, %v788
    %790 = vdwg.mxu0
    %791 = vmatprep.subr.mxu0 %v113
    %792 = vmatpush1.msra.mxu0 %v112
    %793 = vmatprep.subr.mxu0 %v117
    %794 = vmatpush1.msra.mxu0 %v116
    %795 = vmatprep.subr.mxu0 %v121
    %796 = vmatpush1.msra.mxu0 %v120
    %797 = vmatprep.subr.mxu0 %v125
    %798 = vmatpush1.msra.mxu0 %v124
    %799 = vmatprep.subr.mxu0 %v129
    %800 = vmatpush1.msra.mxu0 %v128
    %801 = vmatprep.subr.mxu0 %v133
    %802 = vmatpush1.msra.mxu0 %v132
    %803 = vmatprep.subr.mxu0 %v137
    %804 = vmatpush1.msra.mxu0 %v136
    %805 = vmatprep.subr.mxu0 %v141
    %806 = vmatpush1.msra.mxu0 %v140
    %807 = vmatprep.subr.mxu0 %v145
    %808 = vmatpush1.msra.mxu0 %v144
    %809 = vmatprep.subr.mxu0 %v149
    %810 = vmatpush1.msra.mxu0 %v148
    %811 = vmatprep.subr.mxu0 %v153
    %812 = vmatpush1.msra.mxu0 %v152
    %813 = vmatprep.subr.mxu0 %v157
    %814 = vmatpush1.msra.mxu0 %v156
    %815 = vmatprep.subr.mxu0 %v161
    %816 = vmatpush1.msra.mxu0 %v160
    %817 = vmatprep.subr.mxu0 %v165
    %818 = vmatpush1.msra.mxu0 %v164
    %819 = vmatprep.subr.mxu0 %v169
    %820 = vmatpush1.msra.mxu0 %v168
    %821 = vmatprep.subr.mxu0 %v173
    %822 = vmatpush1.msra.mxu0 %v172
    %823 = vmatprep.subr.mxu0 0.0
    %824 = vmatpush1.msra.mxu0 0.0
    %825 = vmatprep.subr.mxu0 0.0
    %826 = vmatpush1.msra.mxu0 0.0
    %827 = vmatprep.subr.mxu0 0.0
    %828 = vmatpush1.msra.mxu0 0.0
    %829 = vmatprep.subr.mxu0 0.0
    %830 = vmatpush1.msra.mxu0 0.0
    %831 = vmatprep.subr.mxu0 0.0
    %832 = vmatpush1.msra.mxu0 0.0
    %833 = vmatprep.subr.mxu0 0.0
    %834 = vmatpush1.msra.mxu0 0.0
    %835 = vmatprep.subr.mxu0 0.0
    %836 = vmatpush1.msra.mxu0 0.0
    %837 = vmatprep.subr.mxu0 0.0
    %838 = vmatpush1.msra.mxu0 0.0
    %839 = vmatprep.subr.mxu0 0.0
    %840 = vmatpush1.msra.mxu0 0.0
    %841 = vmatprep.subr.mxu0 0.0
    %842 = vmatpush1.msra.mxu0 0.0
    %843 = vmatprep.subr.mxu0 0.0
    %844 = vmatpush1.msra.mxu0 0.0
    %845 = vmatprep.subr.mxu0 0.0
    %846 = vmatpush1.msra.mxu0 0.0
    %847 = vmatprep.subr.mxu0 0.0
    %848 = vmatpush1.msra.mxu0 0.0
    %849 = vmatprep.subr.mxu0 0.0
    %850 = vmatpush1.msra.mxu0 0.0
    %851 = vmatprep.subr.mxu0 0.0
    %852 = vmatpush1.msra.mxu0 0.0
    %853 = vmatprep.subr.mxu0 0.0
    %854 = vmatpush1.msra.mxu0 0.0
    %855 = vmatprep.mubr.f32.mxu0 0.0
    %856 = vmatmul.mubr.f32.gmra.mrb[0].mxu0 %v718
    %v857 = vpop.f32.mrb[0].mxu0
    %v858 = vadd.f32 0.0, %v857
    %v859 = vpop.f32.mrb[0].mxu0
    %v860 = vadd.f32 0.0, %v859
    %861 = vdwg.mxu0
    %v866 = vrot.slane %v787, 5
    %v867 = vrot.slane %v789, 5
    %v868 = vrot.slane %v858, 5
    %v869 = vrot.slane %v860, 5
    %v874 = vadd.f32 %v106, %v866
    %v875 = vadd.f32 %v107, %v867
    %v876 = vadd.f32 %v108, %v868
    %v877 = vadd.f32 %v109, %v869
    %v878 = vxor.u32 %v874, 2147483648
    %v879 = vxor.u32 %v875, 2147483648
    %v880 = vxor.u32 %v877, 2147483648
    %v881 = vmul.f32 %v878, 1.442695
    %v882 = vpow.pop %v881
    %v883 = vmul.f32 %v879, 1.442695
    %v884 = vpow.pop %v883
    %v885 = vmul.f32 %v880, 1.442695
    %v886 = vpow.pop %v885
    %v887 = vadd.f32 %v882, 1.0
    %v888 = vadd.f32 %v884, 1.0
    %v889 = vadd.f32 %v886, 1.0
    %v890 = vrcp.pop %v887
    %v891 = vmul.f32 1.0, %v890
    %v892 = vrcp.pop %v888
    %v893 = vmul.f32 1.0, %v892
    %v894 = vrcp.pop %v889
    %v895 = vmul.f32 1.0, %v894
    %v896 = vtanh.pop %v876
    %v898 = vrot.slane %v714, 7
    %v900 = vmul.f32 %v893, %v898
    %v901 = vmul.f32 %v891, %v896
    %v902 = vadd.f32 %v900, %v901
    %v903 = vtanh.pop %v902
    %v904 = vmul.f32 %v895, %v903
    %v906 = vrot.slane %v904, 3
    %908 = vmatprep.subr.mxu0 %v111
    %909 = vmatpush1.msra.mxu0 %v110
    %910 = vmatprep.subr.mxu0 %v115
    %911 = vmatpush1.msra.mxu0 %v114
    %912 = vmatprep.subr.mxu0 %v119
    %913 = vmatpush1.msra.mxu0 %v118
    %914 = vmatprep.subr.mxu0 %v123
    %915 = vmatpush1.msra.mxu0 %v122
    %916 = vmatprep.subr.mxu0 %v127
    %917 = vmatpush1.msra.mxu0 %v126
    %918 = vmatprep.subr.mxu0 %v131
    %919 = vmatpush1.msra.mxu0 %v130
    %920 = vmatprep.subr.mxu0 %v135
    %921 = vmatpush1.msra.mxu0 %v134
    %922 = vmatprep.subr.mxu0 %v139
    %923 = vmatpush1.msra.mxu0 %v138
    %924 = vmatprep.subr.mxu0 %v143
    %925 = vmatpush1.msra.mxu0 %v142
    %926 = vmatprep.subr.mxu0 %v147
    %927 = vmatpush1.msra.mxu0 %v146
    %928 = vmatprep.subr.mxu0 %v151
    %929 = vmatpush1.msra.mxu0 %v150
    %930 = vmatprep.subr.mxu0 %v155
    %931 = vmatpush1.msra.mxu0 %v154
    %932 = vmatprep.subr.mxu0 %v159
    %933 = vmatpush1.msra.mxu0 %v158
    %934 = vmatprep.subr.mxu0 %v163
    %935 = vmatpush1.msra.mxu0 %v162
    %936 = vmatprep.subr.mxu0 %v167
    %937 = vmatpush1.msra.mxu0 %v166
    %938 = vmatprep.subr.mxu0 %v171
    %939 = vmatpush1.msra.mxu0 %v170
    %940 = vmatprep.subr.mxu0 0.0
    %941 = vmatpush1.msra.mxu0 0.0
    %942 = vmatprep.subr.mxu0 0.0
    %943 = vmatpush1.msra.mxu0 0.0
    %944 = vmatprep.subr.mxu0 0.0
    %945 = vmatpush1.msra.mxu0 0.0
    %946 = vmatprep.subr.mxu0 0.0
    %947 = vmatpush1.msra.mxu0 0.0
    %948 = vmatprep.subr.mxu0 0.0
    %949 = vmatpush1.msra.mxu0 0.0
    %950 = vmatprep.subr.mxu0 0.0
    %951 = vmatpush1.msra.mxu0 0.0
    %952 = vmatprep.subr.mxu0 0.0
    %953 = vmatpush1.msra.mxu0 0.0
    %954 = vmatprep.subr.mxu0 0.0
    %955 = vmatpush1.msra.mxu0 0.0
    %956 = vmatprep.subr.mxu0 0.0
    %957 = vmatpush1.msra.mxu0 0.0
    %958 = vmatprep.subr.mxu0 0.0
    %959 = vmatpush1.msra.mxu0 0.0
    %960 = vmatprep.subr.mxu0 0.0
    %961 = vmatpush1.msra.mxu0 0.0
    %962 = vmatprep.subr.mxu0 0.0
    %963 = vmatpush1.msra.mxu0 0.0
    %964 = vmatprep.subr.mxu0 0.0
    %965 = vmatpush1.msra.mxu0 0.0
    %966 = vmatprep.subr.mxu0 0.0
    %967 = vmatpush1.msra.mxu0 0.0
    %968 = vmatprep.subr.mxu0 0.0
    %969 = vmatpush1.msra.mxu0 0.0
    %970 = vmatprep.subr.mxu0 0.0
    %971 = vmatpush1.msra.mxu0 0.0
    %972 = vmatprep.mubr.f32.mxu0 0.0
    %973 = vmatmul.mubr.f32.gmra.mrb[0].mxu0 %v906
    %v974 = vpop.f32.mrb[0].mxu0
    %v975 = vadd.f32 0.0, %v974
    %v976 = vpop.f32.mrb[0].mxu0
    %v977 = vadd.f32 0.0, %v976
    %978 = vdwg.mxu0
    %979 = vmatprep.subr.mxu0 %v113
    %980 = vmatpush1.msra.mxu0 %v112
    %981 = vmatprep.subr.mxu0 %v117
    %982 = vmatpush1.msra.mxu0 %v116
    %983 = vmatprep.subr.mxu0 %v121
    %984 = vmatpush1.msra.mxu0 %v120
    %985 = vmatprep.subr.mxu0 %v125
    %986 = vmatpush1.msra.mxu0 %v124
    %987 = vmatprep.subr.mxu0 %v129
    %988 = vmatpush1.msra.mxu0 %v128
    %989 = vmatprep.subr.mxu0 %v133
    %990 = vmatpush1.msra.mxu0 %v132
    %991 = vmatprep.subr.mxu0 %v137
    %992 = vmatpush1.msra.mxu0 %v136
    %993 = vmatprep.subr.mxu0 %v141
    %994 = vmatpush1.msra.mxu0 %v140
    %995 = vmatprep.subr.mxu0 %v145
    %996 = vmatpush1.msra.mxu0 %v144
    %997 = vmatprep.subr.mxu0 %v149
    %998 = vmatpush1.msra.mxu0 %v148
    %999 = vmatprep.subr.mxu0 %v153
    %1000 = vmatpush1.msra.mxu0 %v152
    %1001 = vmatprep.subr.mxu0 %v157
    %1002 = vmatpush1.msra.mxu0 %v156
    %1003 = vmatprep.subr.mxu0 %v161
    %1004 = vmatpush1.msra.mxu0 %v160
    %1005 = vmatprep.subr.mxu0 %v165
    %1006 = vmatpush1.msra.mxu0 %v164
    %1007 = vmatprep.subr.mxu0 %v169
    %1008 = vmatpush1.msra.mxu0 %v168
    %1009 = vmatprep.subr.mxu0 %v173
    %1010 = vmatpush1.msra.mxu0 %v172
    %1011 = vmatprep.subr.mxu0 0.0
    %1012 = vmatpush1.msra.mxu0 0.0
    %1013 = vmatprep.subr.mxu0 0.0
    %1014 = vmatpush1.msra.mxu0 0.0
    %1015 = vmatprep.subr.mxu0 0.0
    %1016 = vmatpush1.msra.mxu0 0.0
    %1017 = vmatprep.subr.mxu0 0.0
    %1018 = vmatpush1.msra.mxu0 0.0
    %1019 = vmatprep.subr.mxu0 0.0
    %1020 = vmatpush1.msra.mxu0 0.0
    %1021 = vmatprep.subr.mxu0 0.0
    %1022 = vmatpush1.msra.mxu0 0.0
    %1023 = vmatprep.subr.mxu0 0.0
    %1024 = vmatpush1.msra.mxu0 0.0
    %1025 = vmatprep.subr.mxu0 0.0
    %1026 = vmatpush1.msra.mxu0 0.0
    %1027 = vmatprep.subr.mxu0 0.0
    %1028 = vmatpush1.msra.mxu0 0.0
    %1029 = vmatprep.subr.mxu0 0.0
    %1030 = vmatpush1.msra.mxu0 0.0
    %1031 = vmatprep.subr.mxu0 0.0
    %1032 = vmatpush1.msra.mxu0 0.0
    %1033 = vmatprep.subr.mxu0 0.0
    %1034 = vmatpush1.msra.mxu0 0.0
    %1035 = vmatprep.subr.mxu0 0.0
    %1036 = vmatpush1.msra.mxu0 0.0
    %1037 = vmatprep.subr.mxu0 0.0
    %1038 = vmatpush1.msra.mxu0 0.0
    %1039 = vmatprep.subr.mxu0 0.0
    %1040 = vmatpush1.msra.mxu0 0.0
    %1041 = vmatprep.subr.mxu0 0.0
    %1042 = vmatpush1.msra.mxu0 0.0
    %1043 = vmatprep.mubr.f32.mxu0 0.0
    %1044 = vmatmul.mubr.f32.gmra.mrb[0].mxu0 %v906
    %v1045 = vpop.f32.mrb[0].mxu0
    %v1046 = vadd.f32 0.0, %v1045
    %v1047 = vpop.f32.mrb[0].mxu0
    %v1048 = vadd.f32 0.0, %v1047
    %1049 = vdwg.mxu0
    %v1054 = vrot.slane %v975, 4
    %v1055 = vrot.slane %v977, 4
    %v1056 = vrot.slane %v1046, 4
    %v1057 = vrot.slane %v1048, 4
    %v1062 = vadd.f32 %v106, %v1054
    %v1063 = vadd.f32 %v107, %v1055
    %v1064 = vadd.f32 %v108, %v1056
    %v1065 = vadd.f32 %v109, %v1057
    %v1066 = vxor.u32 %v1062, 2147483648
    %v1067 = vxor.u32 %v1063, 2147483648
    %v1068 = vxor.u32 %v1065, 2147483648
    %v1069 = vmul.f32 %v1066, 1.442695
    %v1070 = vpow.pop %v1069
    %v1071 = vmul.f32 %v1067, 1.442695
    %v1072 = vpow.pop %v1071
    %v1073 = vmul.f32 %v1068, 1.442695
    %v1074 = vpow.pop %v1073
    %v1075 = vadd.f32 %v1070, 1.0
    %v1076 = vadd.f32 %v1072, 1.0
    %v1077 = vadd.f32 %v1074, 1.0
    %v1078 = vrcp.pop %v1075
    %v1079 = vmul.f32 1.0, %v1078
    %v1080 = vrcp.pop %v1076
    %v1081 = vmul.f32 1.0, %v1080
    %v1082 = vrcp.pop %v1077
    %v1083 = vmul.f32 1.0, %v1082
    %v1084 = vtanh.pop %v1064
    %v1086 = vrot.slane %v902, 7
    %v1088 = vmul.f32 %v1081, %v1086
    %v1089 = vmul.f32 %v1079, %v1084
    %v1090 = vadd.f32 %v1088, %v1089
    %v1091 = vtanh.pop %v1090
    %v1092 = vmul.f32 %v1083, %v1091
    %v1094 = vrot.slane %v1092, 4
    %1096 = vmatprep.subr.mxu0 %v111
    %1097 = vmatpush1.msra.mxu0 %v110
    %1098 = vmatprep.subr.mxu0 %v115
    %1099 = vmatpush1.msra.mxu0 %v114
    %1100 = vmatprep.subr.mxu0 %v119
    %1101 = vmatpush1.msra.mxu0 %v118
    %1102 = vmatprep.subr.mxu0 %v123
    %1103 = vmatpush1.msra.mxu0 %v122
    %1104 = vmatprep.subr.mxu0 %v127
    %1105 = vmatpush1.msra.mxu0 %v126
    %1106 = vmatprep.subr.mxu0 %v131
    %1107 = vmatpush1.msra.mxu0 %v130
    %1108 = vmatprep.subr.mxu0 %v135
    %1109 = vmatpush1.msra.mxu0 %v134
    %1110 = vmatprep.subr.mxu0 %v139
    %1111 = vmatpush1.msra.mxu0 %v138
    %1112 = vmatprep.subr.mxu0 %v143
    %1113 = vmatpush1.msra.mxu0 %v142
    %1114 = vmatprep.subr.mxu0 %v147
    %1115 = vmatpush1.msra.mxu0 %v146
    %1116 = vmatprep.subr.mxu0 %v151
    %1117 = vmatpush1.msra.mxu0 %v150
    %1118 = vmatprep.subr.mxu0 %v155
    %1119 = vmatpush1.msra.mxu0 %v154
    %1120 = vmatprep.subr.mxu0 %v159
    %1121 = vmatpush1.msra.mxu0 %v158
    %1122 = vmatprep.subr.mxu0 %v163
    %1123 = vmatpush1.msra.mxu0 %v162
    %1124 = vmatprep.subr.mxu0 %v167
    %1125 = vmatpush1.msra.mxu0 %v166
    %1126 = vmatprep.subr.mxu0 %v171
    %1127 = vmatpush1.msra.mxu0 %v170
    %1128 = vmatprep.subr.mxu0 0.0
    %1129 = vmatpush1.msra.mxu0 0.0
    %1130 = vmatprep.subr.mxu0 0.0
    %1131 = vmatpush1.msra.mxu0 0.0
    %1132 = vmatprep.subr.mxu0 0.0
    %1133 = vmatpush1.msra.mxu0 0.0
    %1134 = vmatprep.subr.mxu0 0.0
    %1135 = vmatpush1.msra.mxu0 0.0
    %1136 = vmatprep.subr.mxu0 0.0
    %1137 = vmatpush1.msra.mxu0 0.0
    %1138 = vmatprep.subr.mxu0 0.0
    %1139 = vmatpush1.msra.mxu0 0.0
    %1140 = vmatprep.subr.mxu0 0.0
    %1141 = vmatpush1.msra.mxu0 0.0
    %1142 = vmatprep.subr.mxu0 0.0
    %1143 = vmatpush1.msra.mxu0 0.0
    %1144 = vmatprep.subr.mxu0 0.0
    %1145 = vmatpush1.msra.mxu0 0.0
    %1146 = vmatprep.subr.mxu0 0.0
    %1147 = vmatpush1.msra.mxu0 0.0
    %1148 = vmatprep.subr.mxu0 0.0
    %1149 = vmatpush1.msra.mxu0 0.0
    %1150 = vmatprep.subr.mxu0 0.0
    %1151 = vmatpush1.msra.mxu0 0.0
    %1152 = vmatprep.subr.mxu0 0.0
    %1153 = vmatpush1.msra.mxu0 0.0
    %1154 = vmatprep.subr.mxu0 0.0
    %1155 = vmatpush1.msra.mxu0 0.0
    %1156 = vmatprep.subr.mxu0 0.0
    %1157 = vmatpush1.msra.mxu0 0.0
    %1158 = vmatprep.subr.mxu0 0.0
    %1159 = vmatpush1.msra.mxu0 0.0
    %1160 = vmatprep.mubr.f32.mxu0 0.0
    %1161 = vmatmul.mubr.f32.gmra.mrb[0].mxu0 %v1094
    %v1162 = vpop.f32.mrb[0].mxu0
    %v1163 = vadd.f32 0.0, %v1162
    %v1164 = vpop.f32.mrb[0].mxu0
    %v1165 = vadd.f32 0.0, %v1164
    %1166 = vdwg.mxu0
    %1167 = vmatprep.subr.mxu0 %v113
    %1168 = vmatpush1.msra.mxu0 %v112
    %1169 = vmatprep.subr.mxu0 %v117
    %1170 = vmatpush1.msra.mxu0 %v116
    %1171 = vmatprep.subr.mxu0 %v121
    %1172 = vmatpush1.msra.mxu0 %v120
    %1173 = vmatprep.subr.mxu0 %v125
    %1174 = vmatpush1.msra.mxu0 %v124
    %1175 = vmatprep.subr.mxu0 %v129
    %1176 = vmatpush1.msra.mxu0 %v128
    %1177 = vmatprep.subr.mxu0 %v133
    %1178 = vmatpush1.msra.mxu0 %v132
    %1179 = vmatprep.subr.mxu0 %v137
    %1180 = vmatpush1.msra.mxu0 %v136
    %1181 = vmatprep.subr.mxu0 %v141
    %1182 = vmatpush1.msra.mxu0 %v140
    %1183 = vmatprep.subr.mxu0 %v145
    %1184 = vmatpush1.msra.mxu0 %v144
    %1185 = vmatprep.subr.mxu0 %v149
    %1186 = vmatpush1.msra.mxu0 %v148
    %1187 = vmatprep.subr.mxu0 %v153
    %1188 = vmatpush1.msra.mxu0 %v152
    %1189 = vmatprep.subr.mxu0 %v157
    %1190 = vmatpush1.msra.mxu0 %v156
    %1191 = vmatprep.subr.mxu0 %v161
    %1192 = vmatpush1.msra.mxu0 %v160
    %1193 = vmatprep.subr.mxu0 %v165
    %1194 = vmatpush1.msra.mxu0 %v164
    %1195 = vmatprep.subr.mxu0 %v169
    %1196 = vmatpush1.msra.mxu0 %v168
    %1197 = vmatprep.subr.mxu0 %v173
    %1198 = vmatpush1.msra.mxu0 %v172
    %1199 = vmatprep.subr.mxu0 0.0
    %1200 = vmatpush1.msra.mxu0 0.0
    %1201 = vmatprep.subr.mxu0 0.0
    %1202 = vmatpush1.msra.mxu0 0.0
    %1203 = vmatprep.subr.mxu0 0.0
    %1204 = vmatpush1.msra.mxu0 0.0
    %1205 = vmatprep.subr.mxu0 0.0
    %1206 = vmatpush1.msra.mxu0 0.0
    %1207 = vmatprep.subr.mxu0 0.0
    %1208 = vmatpush1.msra.mxu0 0.0
    %1209 = vmatprep.subr.mxu0 0.0
    %1210 = vmatpush1.msra.mxu0 0.0
    %1211 = vmatprep.subr.mxu0 0.0
    %1212 = vmatpush1.msra.mxu0 0.0
    %1213 = vmatprep.subr.mxu0 0.0
    %1214 = vmatpush1.msra.mxu0 0.0
    %1215 = vmatprep.subr.mxu0 0.0
    %1216 = vmatpush1.msra.mxu0 0.0
    %1217 = vmatprep.subr.mxu0 0.0
    %1218 = vmatpush1.msra.mxu0 0.0
    %1219 = vmatprep.subr.mxu0 0.0
    %1220 = vmatpush1.msra.mxu0 0.0
    %1221 = vmatprep.subr.mxu0 0.0
    %1222 = vmatpush1.msra.mxu0 0.0
    %1223 = vmatprep.subr.mxu0 0.0
    %1224 = vmatpush1.msra.mxu0 0.0
    %1225 = vmatprep.subr.mxu0 0.0
    %1226 = vmatpush1.msra.mxu0 0.0
    %1227 = vmatprep.subr.mxu0 0.0
    %1228 = vmatpush1.msra.mxu0 0.0
    %1229 = vmatprep.subr.mxu0 0.0
    %1230 = vmatpush1.msra.mxu0 0.0
    %1231 = vmatprep.mubr.f32.mxu0 0.0
    %1232 = vmatmul.mubr.f32.gmra.mrb[0].mxu0 %v1094
    %v1233 = vpop.f32.mrb[0].mxu0
    %v1234 = vadd.f32 0.0, %v1233
    %v1235 = vpop.f32.mrb[0].mxu0
    %v1236 = vadd.f32 0.0, %v1235
    %1237 = vdwg.mxu0
    %v1242 = vrot.slane %v1163, 3
    %v1243 = vrot.slane %v1165, 3
    %v1244 = vrot.slane %v1234, 3
    %v1245 = vrot.slane %v1236, 3
    %v1250 = vadd.f32 %v106, %v1242
    %v1251 = vadd.f32 %v107, %v1243
    %v1252 = vadd.f32 %v108, %v1244
    %v1253 = vadd.f32 %v109, %v1245
    %v1254 = vxor.u32 %v1250, 2147483648
    %v1255 = vxor.u32 %v1251, 2147483648
    %v1256 = vxor.u32 %v1253, 2147483648
    %v1257 = vmul.f32 %v1254, 1.442695
    %v1258 = vpow.pop %v1257
    %v1259 = vmul.f32 %v1255, 1.442695
    %v1260 = vpow.pop %v1259
    %v1261 = vmul.f32 %v1256, 1.442695
    %v1262 = vpow.pop %v1261
    %v1263 = vadd.f32 %v1258, 1.0
    %v1264 = vadd.f32 %v1260, 1.0
    %v1265 = vadd.f32 %v1262, 1.0
    %v1266 = vrcp.pop %v1263
    %v1267 = vmul.f32 1.0, %v1266
    %v1268 = vrcp.pop %v1264
    %v1269 = vmul.f32 1.0, %v1268
    %v1270 = vrcp.pop %v1265
    %v1271 = vmul.f32 1.0, %v1270
    %v1272 = vtanh.pop %v1252
    %v1274 = vrot.slane %v1090, 7
    %v1276 = vmul.f32 %v1269, %v1274
    %v1277 = vmul.f32 %v1267, %v1272
    %v1278 = vadd.f32 %v1276, %v1277
    %v1279 = vtanh.pop %v1278
    %v1280 = vmul.f32 %v1271, %v1279
    %v1282 = vrot.slane %v1280, 5
    %1284 = vmatprep.subr.mxu0 %v111
    %1285 = vmatpush1.msra.mxu0 %v110
    %1286 = vmatprep.subr.mxu0 %v115
    %1287 = vmatpush1.msra.mxu0 %v114
    %1288 = vmatprep.subr.mxu0 %v119
    %1289 = vmatpush1.msra.mxu0 %v118
    %1290 = vmatprep.subr.mxu0 %v123
    %1291 = vmatpush1.msra.mxu0 %v122
    %1292 = vmatprep.subr.mxu0 %v127
    %1293 = vmatpush1.msra.mxu0 %v126
    %1294 = vmatprep.subr.mxu0 %v131
    %1295 = vmatpush1.msra.mxu0 %v130
    %1296 = vmatprep.subr.mxu0 %v135
    %1297 = vmatpush1.msra.mxu0 %v134
    %1298 = vmatprep.subr.mxu0 %v139
    %1299 = vmatpush1.msra.mxu0 %v138
    %1300 = vmatprep.subr.mxu0 %v143
    %1301 = vmatpush1.msra.mxu0 %v142
    %1302 = vmatprep.subr.mxu0 %v147
    %1303 = vmatpush1.msra.mxu0 %v146
    %1304 = vmatprep.subr.mxu0 %v151
    %1305 = vmatpush1.msra.mxu0 %v150
    %1306 = vmatprep.subr.mxu0 %v155
    %1307 = vmatpush1.msra.mxu0 %v154
    %1308 = vmatprep.subr.mxu0 %v159
    %1309 = vmatpush1.msra.mxu0 %v158
    %1310 = vmatprep.subr.mxu0 %v163
    %1311 = vmatpush1.msra.mxu0 %v162
    %1312 = vmatprep.subr.mxu0 %v167
    %1313 = vmatpush1.msra.mxu0 %v166
    %1314 = vmatprep.subr.mxu0 %v171
    %1315 = vmatpush1.msra.mxu0 %v170
    %1316 = vmatprep.subr.mxu0 0.0
    %1317 = vmatpush1.msra.mxu0 0.0
    %1318 = vmatprep.subr.mxu0 0.0
    %1319 = vmatpush1.msra.mxu0 0.0
    %1320 = vmatprep.subr.mxu0 0.0
    %1321 = vmatpush1.msra.mxu0 0.0
    %1322 = vmatprep.subr.mxu0 0.0
    %1323 = vmatpush1.msra.mxu0 0.0
    %1324 = vmatprep.subr.mxu0 0.0
    %1325 = vmatpush1.msra.mxu0 0.0
    %1326 = vmatprep.subr.mxu0 0.0
    %1327 = vmatpush1.msra.mxu0 0.0
    %1328 = vmatprep.subr.mxu0 0.0
    %1329 = vmatpush1.msra.mxu0 0.0
    %1330 = vmatprep.subr.mxu0 0.0
    %1331 = vmatpush1.msra.mxu0 0.0
    %1332 = vmatprep.subr.mxu0 0.0
    %1333 = vmatpush1.msra.mxu0 0.0
    %1334 = vmatprep.subr.mxu0 0.0
    %1335 = vmatpush1.msra.mxu0 0.0
    %1336 = vmatprep.subr.mxu0 0.0
    %1337 = vmatpush1.msra.mxu0 0.0
    %1338 = vmatprep.subr.mxu0 0.0
    %1339 = vmatpush1.msra.mxu0 0.0
    %1340 = vmatprep.subr.mxu0 0.0
    %1341 = vmatpush1.msra.mxu0 0.0
    %1342 = vmatprep.subr.mxu0 0.0
    %1343 = vmatpush1.msra.mxu0 0.0
    %1344 = vmatprep.subr.mxu0 0.0
    %1345 = vmatpush1.msra.mxu0 0.0
    %1346 = vmatprep.subr.mxu0 0.0
    %1347 = vmatpush1.msra.mxu0 0.0
    %1348 = vmatprep.mubr.f32.mxu0 0.0
    %1349 = vmatmul.mubr.f32.gmra.mrb[0].mxu0 %v1282
    %v1350 = vpop.f32.mrb[0].mxu0
    %v1351 = vadd.f32 0.0, %v1350
    %v1352 = vpop.f32.mrb[0].mxu0
    %v1353 = vadd.f32 0.0, %v1352
    %1354 = vdwg.mxu0
    %1355 = vmatprep.subr.mxu0 %v113
    %1356 = vmatpush1.msra.mxu0 %v112
    %1357 = vmatprep.subr.mxu0 %v117
    %1358 = vmatpush1.msra.mxu0 %v116
    %1359 = vmatprep.subr.mxu0 %v121
    %1360 = vmatpush1.msra.mxu0 %v120
    %1361 = vmatprep.subr.mxu0 %v125
    %1362 = vmatpush1.msra.mxu0 %v124
    %1363 = vmatprep.subr.mxu0 %v129
    %1364 = vmatpush1.msra.mxu0 %v128
    %1365 = vmatprep.subr.mxu0 %v133
    %1366 = vmatpush1.msra.mxu0 %v132
    %1367 = vmatprep.subr.mxu0 %v137
    %1368 = vmatpush1.msra.mxu0 %v136
    %1369 = vmatprep.subr.mxu0 %v141
    %1370 = vmatpush1.msra.mxu0 %v140
    %1371 = vmatprep.subr.mxu0 %v145
    %1372 = vmatpush1.msra.mxu0 %v144
    %1373 = vmatprep.subr.mxu0 %v149
    %1374 = vmatpush1.msra.mxu0 %v148
    %1375 = vmatprep.subr.mxu0 %v153
    %1376 = vmatpush1.msra.mxu0 %v152
    %1377 = vmatprep.subr.mxu0 %v157
    %1378 = vmatpush1.msra.mxu0 %v156
    %1379 = vmatprep.subr.mxu0 %v161
    %1380 = vmatpush1.msra.mxu0 %v160
    %1381 = vmatprep.subr.mxu0 %v165
    %1382 = vmatpush1.msra.mxu0 %v164
    %1383 = vmatprep.subr.mxu0 %v169
    %1384 = vmatpush1.msra.mxu0 %v168
    %1385 = vmatprep.subr.mxu0 %v173
    %1386 = vmatpush1.msra.mxu0 %v172
    %1387 = vmatprep.subr.mxu0 0.0
    %1388 = vmatpush1.msra.mxu0 0.0
    %1389 = vmatprep.subr.mxu0 0.0
    %1390 = vmatpush1.msra.mxu0 0.0
    %1391 = vmatprep.subr.mxu0 0.0
    %1392 = vmatpush1.msra.mxu0 0.0
    %1393 = vmatprep.subr.mxu0 0.0
    %1394 = vmatpush1.msra.mxu0 0.0
    %1395 = vmatprep.subr.mxu0 0.0
    %1396 = vmatpush1.msra.mxu0 0.0
    %1397 = vmatprep.subr.mxu0 0.0
    %1398 = vmatpush1.msra.mxu0 0.0
    %1399 = vmatprep.subr.mxu0 0.0
    %1400 = vmatpush1.msra.mxu0 0.0
    %1401 = vmatprep.subr.mxu0 0.0
    %1402 = vmatpush1.msra.mxu0 0.0
    %1403 = vmatprep.subr.mxu0 0.0
    %1404 = vmatpush1.msra.mxu0 0.0
    %1405 = vmatprep.subr.mxu0 0.0
    %1406 = vmatpush1.msra.mxu0 0.0
    %1407 = vmatprep.subr.mxu0 0.0
    %1408 = vmatpush1.msra.mxu0 0.0
    %1409 = vmatprep.subr.mxu0 0.0
    %1410 = vmatpush1.msra.mxu0 0.0
    %1411 = vmatprep.subr.mxu0 0.0
    %1412 = vmatpush1.msra.mxu0 0.0
    %1413 = vmatprep.subr.mxu0 0.0
    %1414 = vmatpush1.msra.mxu0 0.0
    %1415 = vmatprep.subr.mxu0 0.0
    %1416 = vmatpush1.msra.mxu0 0.0
    %1417 = vmatprep.subr.mxu0 0.0
    %1418 = vmatpush1.msra.mxu0 0.0
    %1419 = vmatprep.mubr.f32.mxu0 0.0
    %1420 = vmatmul.mubr.f32.gmra.mrb[0].mxu0 %v1282
    %v1421 = vpop.f32.mrb[0].mxu0
    %v1422 = vadd.f32 0.0, %v1421
    %v1423 = vpop.f32.mrb[0].mxu0
    %v1424 = vadd.f32 0.0, %v1423
    %1425 = vdwg.mxu0
    %v1430 = vrot.slane %v1351, 2
    %v1431 = vrot.slane %v1353, 2
    %v1432 = vrot.slane %v1422, 2
    %v1433 = vrot.slane %v1424, 2
    %v1438 = vadd.f32 %v106, %v1430
    %v1439 = vadd.f32 %v107, %v1431
    %v1440 = vadd.f32 %v108, %v1432
    %v1441 = vadd.f32 %v109, %v1433
    %v1442 = vxor.u32 %v1438, 2147483648
    %v1443 = vxor.u32 %v1439, 2147483648
    %v1444 = vxor.u32 %v1441, 2147483648
    %v1445 = vmul.f32 %v1442, 1.442695
    %v1446 = vpow.pop %v1445
    %v1447 = vmul.f32 %v1443, 1.442695
    %v1448 = vpow.pop %v1447
    %v1449 = vmul.f32 %v1444, 1.442695
    %v1450 = vpow.pop %v1449
    %v1451 = vadd.f32 %v1446, 1.0
    %v1452 = vadd.f32 %v1448, 1.0
    %v1453 = vadd.f32 %v1450, 1.0
    %v1454 = vrcp.pop %v1451
    %v1455 = vmul.f32 1.0, %v1454
    %v1456 = vrcp.pop %v1452
    %v1457 = vmul.f32 1.0, %v1456
    %v1458 = vrcp.pop %v1453
    %v1459 = vmul.f32 1.0, %v1458
    %v1460 = vtanh.pop %v1440
    %v1462 = vrot.slane %v1278, 7
    %v1464 = vmul.f32 %v1457, %v1462
    %v1465 = vmul.f32 %v1455, %v1460
    %v1466 = vadd.f32 %v1464, %v1465
    %v1467 = vtanh.pop %v1466
    %v1468 = vmul.f32 %v1459, %v1467
    %v1470 = vrot.slane %v1468, 6
    %1472 = vmatprep.subr.mxu0 %v111
    %1473 = vmatpush1.msra.mxu0 %v110
    %1474 = vmatprep.subr.mxu0 %v115
    %1475 = vmatpush1.msra.mxu0 %v114
    %1476 = vmatprep.subr.mxu0 %v119
    %1477 = vmatpush1.msra.mxu0 %v118
    %1478 = vmatprep.subr.mxu0 %v123
    %1479 = vmatpush1.msra.mxu0 %v122
    %1480 = vmatprep.subr.mxu0 %v127
    %1481 = vmatpush1.msra.mxu0 %v126
    %1482 = vmatprep.subr.mxu0 %v131
    %1483 = vmatpush1.msra.mxu0 %v130
    %1484 = vmatprep.subr.mxu0 %v135
    %1485 = vmatpush1.msra.mxu0 %v134
    %1486 = vmatprep.subr.mxu0 %v139
    %1487 = vmatpush1.msra.mxu0 %v138
    %1488 = vmatprep.subr.mxu0 %v143
    %1489 = vmatpush1.msra.mxu0 %v142
    %1490 = vmatprep.subr.mxu0 %v147
    %1491 = vmatpush1.msra.mxu0 %v146
    %1492 = vmatprep.subr.mxu0 %v151
    %1493 = vmatpush1.msra.mxu0 %v150
    %1494 = vmatprep.subr.mxu0 %v155
    %1495 = vmatpush1.msra.mxu0 %v154
    %1496 = vmatprep.subr.mxu0 %v159
    %1497 = vmatpush1.msra.mxu0 %v158
    %1498 = vmatprep.subr.mxu0 %v163
    %1499 = vmatpush1.msra.mxu0 %v162
    %1500 = vmatprep.subr.mxu0 %v167
    %1501 = vmatpush1.msra.mxu0 %v166
    %1502 = vmatprep.subr.mxu0 %v171
    %1503 = vmatpush1.msra.mxu0 %v170
    %1504 = vmatprep.subr.mxu0 0.0
    %1505 = vmatpush1.msra.mxu0 0.0
    %1506 = vmatprep.subr.mxu0 0.0
    %1507 = vmatpush1.msra.mxu0 0.0
    %1508 = vmatprep.subr.mxu0 0.0
    %1509 = vmatpush1.msra.mxu0 0.0
    %1510 = vmatprep.subr.mxu0 0.0
    %1511 = vmatpush1.msra.mxu0 0.0
    %1512 = vmatprep.subr.mxu0 0.0
    %1513 = vmatpush1.msra.mxu0 0.0
    %1514 = vmatprep.subr.mxu0 0.0
    %1515 = vmatpush1.msra.mxu0 0.0
    %1516 = vmatprep.subr.mxu0 0.0
    %1517 = vmatpush1.msra.mxu0 0.0
    %1518 = vmatprep.subr.mxu0 0.0
    %1519 = vmatpush1.msra.mxu0 0.0
    %1520 = vmatprep.subr.mxu0 0.0
    %1521 = vmatpush1.msra.mxu0 0.0
    %1522 = vmatprep.subr.mxu0 0.0
    %1523 = vmatpush1.msra.mxu0 0.0
    %1524 = vmatprep.subr.mxu0 0.0
    %1525 = vmatpush1.msra.mxu0 0.0
    %1526 = vmatprep.subr.mxu0 0.0
    %1527 = vmatpush1.msra.mxu0 0.0
    %1528 = vmatprep.subr.mxu0 0.0
    %1529 = vmatpush1.msra.mxu0 0.0
    %1530 = vmatprep.subr.mxu0 0.0
    %1531 = vmatpush1.msra.mxu0 0.0
    %1532 = vmatprep.subr.mxu0 0.0
    %1533 = vmatpush1.msra.mxu0 0.0
    %1534 = vmatprep.subr.mxu0 0.0
    %1535 = vmatpush1.msra.mxu0 0.0
    %1536 = vmatprep.mubr.f32.mxu0 0.0
    %1537 = vmatmul.mubr.f32.gmra.mrb[0].mxu0 %v1470
    %v1538 = vpop.f32.mrb[0].mxu0
    %v1539 = vadd.f32 0.0, %v1538
    %v1540 = vpop.f32.mrb[0].mxu0
    %v1541 = vadd.f32 0.0, %v1540
    %1542 = vdwg.mxu0
    %1543 = vmatprep.subr.mxu0 %v113
    %1544 = vmatpush1.msra.mxu0 %v112
    %1545 = vmatprep.subr.mxu0 %v117
    %1546 = vmatpush1.msra.mxu0 %v116
    %1547 = vmatprep.subr.mxu0 %v121
    %1548 = vmatpush1.msra.mxu0 %v120
    %1549 = vmatprep.subr.mxu0 %v125
    %1550 = vmatpush1.msra.mxu0 %v124
    %1551 = vmatprep.subr.mxu0 %v129
    %1552 = vmatpush1.msra.mxu0 %v128
    %1553 = vmatprep.subr.mxu0 %v133
    %1554 = vmatpush1.msra.mxu0 %v132
    %1555 = vmatprep.subr.mxu0 %v137
    %1556 = vmatpush1.msra.mxu0 %v136
    %1557 = vmatprep.subr.mxu0 %v141
    %1558 = vmatpush1.msra.mxu0 %v140
    %1559 = vmatprep.subr.mxu0 %v145
    %1560 = vmatpush1.msra.mxu0 %v144
    %1561 = vmatprep.subr.mxu0 %v149
    %1562 = vmatpush1.msra.mxu0 %v148
    %1563 = vmatprep.subr.mxu0 %v153
    %1564 = vmatpush1.msra.mxu0 %v152
    %1565 = vmatprep.subr.mxu0 %v157
    %1566 = vmatpush1.msra.mxu0 %v156
    %1567 = vmatprep.subr.mxu0 %v161
    %1568 = vmatpush1.msra.mxu0 %v160
    %1569 = vmatprep.subr.mxu0 %v165
    %1570 = vmatpush1.msra.mxu0 %v164
    %1571 = vmatprep.subr.mxu0 %v169
    %1572 = vmatpush1.msra.mxu0 %v168
    %1573 = vmatprep.subr.mxu0 %v173
    %1574 = vmatpush1.msra.mxu0 %v172
    %1575 = vmatprep.subr.mxu0 0.0
    %1576 = vmatpush1.msra.mxu0 0.0
    %1577 = vmatprep.subr.mxu0 0.0
    %1578 = vmatpush1.msra.mxu0 0.0
    %1579 = vmatprep.subr.mxu0 0.0
    %1580 = vmatpush1.msra.mxu0 0.0
    %1581 = vmatprep.subr.mxu0 0.0
    %1582 = vmatpush1.msra.mxu0 0.0
    %1583 = vmatprep.subr.mxu0 0.0
    %1584 = vmatpush1.msra.mxu0 0.0
    %1585 = vmatprep.subr.mxu0 0.0
    %1586 = vmatpush1.msra.mxu0 0.0
    %1587 = vmatprep.subr.mxu0 0.0
    %1588 = vmatpush1.msra.mxu0 0.0
    %1589 = vmatprep.subr.mxu0 0.0
    %1590 = vmatpush1.msra.mxu0 0.0
    %1591 = vmatprep.subr.mxu0 0.0
    %1592 = vmatpush1.msra.mxu0 0.0
    %1593 = vmatprep.subr.mxu0 0.0
    %1594 = vmatpush1.msra.mxu0 0.0
    %1595 = vmatprep.subr.mxu0 0.0
    %1596 = vmatpush1.msra.mxu0 0.0
    %1597 = vmatprep.subr.mxu0 0.0
    %1598 = vmatpush1.msra.mxu0 0.0
    %1599 = vmatprep.subr.mxu0 0.0
    %1600 = vmatpush1.msra.mxu0 0.0
    %1601 = vmatprep.subr.mxu0 0.0
    %1602 = vmatpush1.msra.mxu0 0.0
    %1603 = vmatprep.subr.mxu0 0.0
    %1604 = vmatpush1.msra.mxu0 0.0
    %1605 = vmatprep.subr.mxu0 0.0
    %1606 = vmatpush1.msra.mxu0 0.0
    %1607 = vmatprep.mubr.f32.mxu0 0.0
    %1608 = vmatmul.mubr.f32.gmra.mrb[0].mxu0 %v1470
    %v1609 = vpop.f32.mrb[0].mxu0
    %v1610 = vadd.f32 0.0, %v1609
    %v1611 = vpop.f32.mrb[0].mxu0
    %v1612 = vadd.f32 0.0, %v1611
    %1613 = vdwg.mxu0
    %v1618 = vrot.slane %v1539, 1
    %v1619 = vrot.slane %v1541, 1
    %v1620 = vrot.slane %v1610, 1
    %v1621 = vrot.slane %v1612, 1
    %v1626 = vadd.f32 %v106, %v1618
    %v1627 = vadd.f32 %v107, %v1619
    %v1628 = vadd.f32 %v108, %v1620
    %v1629 = vadd.f32 %v109, %v1621
    %v1630 = vxor.u32 %v1626, 2147483648
    %v1631 = vxor.u32 %v1627, 2147483648
    %v1632 = vxor.u32 %v1629, 2147483648
    %v1633 = vmul.f32 %v1630, 1.442695
    %v1634 = vpow.pop %v1633
    %v1635 = vmul.f32 %v1631, 1.442695
    %v1636 = vpow.pop %v1635
    %v1637 = vmul.f32 %v1632, 1.442695
    %v1638 = vpow.pop %v1637
    %v1639 = vadd.f32 %v1634, 1.0
    %v1640 = vadd.f32 %v1636, 1.0
    %v1641 = vadd.f32 %v1638, 1.0
    %v1642 = vrcp.pop %v1639
    %v1643 = vmul.f32 1.0, %v1642
    %v1644 = vrcp.pop %v1640
    %v1645 = vmul.f32 1.0, %v1644
    %v1646 = vrcp.pop %v1641
    %v1647 = vmul.f32 1.0, %v1646
    %v1648 = vtanh.pop %v1628
    %v1650 = vrot.slane %v1466, 7
    %v1652 = vmul.f32 %v1645, %v1650
    %v1653 = vmul.f32 %v1643, %v1648
    %v1654 = vadd.f32 %v1652, %v1653
    %v1655 = vtanh.pop %v1654
    %v1656 = vmul.f32 %v1647, %v1655
    %v1657 = vld [vmem:[#allocation5] sm:$0xff]
    %v1658 = vld [vmem:[#allocation5 + $0x8] sm:$0xff]
    %v1659 = vld [vmem:[#allocation5 + $0x10] sm:$0xff]
    %v1660 = vld [vmem:[#allocation5 + $0x18] sm:$0xff]
    %v1661 = vld [vmem:[#allocation5 + $0x20] sm:$0xff]
    %v1662 = vld [vmem:[#allocation5 + $0x28] sm:$0xff]
    %v1663 = vld [vmem:[#allocation5 + $0x30] sm:$0xff]
    %v1664 = vld [vmem:[#allocation5 + $0x38] sm:$0xff]
    %v1665 = vld [vmem:[#allocation5 + $0x40] sm:$0xff]
    %v1666 = vld [vmem:[#allocation5 + $0x48] sm:$0xff]
    %v1667 = vld [vmem:[#allocation5 + $0x50] sm:$0xff]
    %v1668 = vld [vmem:[#allocation5 + $0x58] sm:$0xff]
    %v1669 = vld [vmem:[#allocation5 + $0x60] sm:$0xff]
    %v1670 = vld [vmem:[#allocation5 + $0x68] sm:$0xff]
    %v1671 = vld [vmem:[#allocation5 + $0x70] sm:$0xff]
    %v1672 = vld [vmem:[#allocation5 + $0x78] sm:$0xff]
    %v1673 = vld [vmem:[%s5] sm:$0x1]
    %v1675 = vrot.slane %v1656, 7
    %1677 = vmatprep.subr.mxu0 0.0
    %1678 = vmatpush1.msra.mxu0 %v1657
    %1679 = vmatprep.subr.mxu0 0.0
    %1680 = vmatpush1.msra.mxu0 %v1658
    %1681 = vmatprep.subr.mxu0 0.0
    %1682 = vmatpush1.msra.mxu0 %v1659
    %1683 = vmatprep.subr.mxu0 0.0
    %1684 = vmatpush1.msra.mxu0 %v1660
    %1685 = vmatprep.subr.mxu0 0.0
    %1686 = vmatpush1.msra.mxu0 %v1661
    %1687 = vmatprep.subr.mxu0 0.0
    %1688 = vmatpush1.msra.mxu0 %v1662
    %1689 = vmatprep.subr.mxu0 0.0
    %1690 = vmatpush1.msra.mxu0 %v1663
    %1691 = vmatprep.subr.mxu0 0.0
    %1692 = vmatpush1.msra.mxu0 %v1664
    %1693 = vmatprep.subr.mxu0 0.0
    %1694 = vmatpush1.msra.mxu0 %v1665
    %1695 = vmatprep.subr.mxu0 0.0
    %1696 = vmatpush1.msra.mxu0 %v1666
    %1697 = vmatprep.subr.mxu0 0.0
    %1698 = vmatpush1.msra.mxu0 %v1667
    %1699 = vmatprep.subr.mxu0 0.0
    %1700 = vmatpush1.msra.mxu0 %v1668
    %1701 = vmatprep.subr.mxu0 0.0
    %1702 = vmatpush1.msra.mxu0 %v1669
    %1703 = vmatprep.subr.mxu0 0.0
    %1704 = vmatpush1.msra.mxu0 %v1670
    %1705 = vmatprep.subr.mxu0 0.0
    %1706 = vmatpush1.msra.mxu0 %v1671
    %1707 = vmatprep.subr.mxu0 0.0
    %1708 = vmatpush1.msra.mxu0 %v1672
    %1709 = vmatprep.subr.mxu0 0.0
    %1710 = vmatpush1.msra.mxu0 0.0
    %1711 = vmatprep.subr.mxu0 0.0
    %1712 = vmatpush1.msra.mxu0 0.0
    %1713 = vmatprep.subr.mxu0 0.0
    %1714 = vmatpush1.msra.mxu0 0.0
    %1715 = vmatprep.subr.mxu0 0.0
    %1716 = vmatpush1.msra.mxu0 0.0
    %1717 = vmatprep.subr.mxu0 0.0
    %1718 = vmatpush1.msra.mxu0 0.0
    %1719 = vmatprep.subr.mxu0 0.0
    %1720 = vmatpush1.msra.mxu0 0.0
    %1721 = vmatprep.subr.mxu0 0.0
    %1722 = vmatpush1.msra.mxu0 0.0
    %1723 = vmatprep.subr.mxu0 0.0
    %1724 = vmatpush1.msra.mxu0 0.0
    %1725 = vmatprep.subr.mxu0 0.0
    %1726 = vmatpush1.msra.mxu0 0.0
    %1727 = vmatprep.subr.mxu0 0.0
    %1728 = vmatpush1.msra.mxu0 0.0
    %1729 = vmatprep.subr.mxu0 0.0
    %1730 = vmatpush1.msra.mxu0 0.0
    %1731 = vmatprep.subr.mxu0 0.0
    %1732 = vmatpush1.msra.mxu0 0.0
    %1733 = vmatprep.subr.mxu0 0.0
    %1734 = vmatpush1.msra.mxu0 0.0
    %1735 = vmatprep.subr.mxu0 0.0
    %1736 = vmatpush1.msra.mxu0 0.0
    %1737 = vmatprep.subr.mxu0 0.0
    %1738 = vmatpush1.msra.mxu0 0.0
    %1739 = vmatprep.subr.mxu0 0.0
    %1740 = vmatpush1.msra.mxu0 0.0
    %1741 = vmatprep.mubr.f32.mxu0 0.0
    %1742 = vmatmul.mubr.f32.gmra.mrb[0].mxu0 %v1675
    %v1743 = vpop.f32.mrb[0].mxu0
    %v1744 = vadd.f32 %v1673, %v1743
    %v1745 = vpop.f32.mrb[0].mxu0
    %1746 = vdwg.mxu0
    %1747 = vst [vmem:[#allocation7] sm:$0x1] %v1744
    // Predicated region
    $region34: #{tpu_custom_call.1} parent=1 // pred_check
      _
    $region35: #{tpu_custom_call.1} parent=1 // pred_check_branch
      %1749 = sbr.rel (0) target = $region37
    $region36: #{tpu_custom_call.1} parent=1 // pred_region
      %s1751 = ssub.s32 16, 16
      %1752 = vsyncadd [#allocation4], %s1751
      %s1754 = sshll.u32 [#allocation7], 4
      %s1755 = int_to_ptr.vmem [resolvable:$true] %s1754
      %1757 = dma.vmem_to_hbm [thread:$0]  %s1755, 16, %s6, [#allocation4]
    $region37: #{tpu_custom_call.1} parent=1 // pred_fallthru
      _
    // Predicated region
    $region38: #{tpu_custom_call.1} parent=1 // pred_check
      _
    $region39: #{tpu_custom_call.1} parent=1 // pred_check_branch
      %1759 = sbr.rel (0) target = $region41
    $region40: #{tpu_custom_call.1} parent=1 // pred_region
      %1760 = dma.done [#allocation4], 16
    $region41: #{tpu_custom_call.1} parent=1 // pred_fallthru
      _
    %1761 = vsyncpa [#allocation3], 1
    %1762 = vsyncpa [#allocation6], 1
    %1763 = vsyncpa [#allocation4], 1

</llo_original>
